<compile_context>
chip_gen: v5e
topology: v5e:2x2
jax: 0.10.0
libtpu: 0.0.40
codegen_flags: <defaults>
</compile_context>

<pallas_src>
import functools
import jax
import jax.numpy as jnp
from jax.experimental import pallas as pl
from jax.experimental.pallas import tpu as pltpu

NEG_INF = -1e9
LN_EPS = 1e-5
VMEM_LIMIT = 32 * 1024 * 1024  # safe on v5e(128M)/v6e(128M)/v7x(64M) physical VMEM


def _cparams(dims):
    return pltpu.CompilerParams(dimension_semantics=dims,
                                vmem_limit_bytes=VMEM_LIMIT)


def _pick_tile(dim, target, granule):
    """Largest tile <= target that is a multiple of `granule` and divides `dim`;
    falls back to the full dim (always legal for BlockSpec)."""
    if dim <= target:
        return dim
    t = (target // granule) * granule
    while t >= granule:
        if dim % t == 0:
            return t
        t -= granule
    return dim


def _ln_rows(y, g_ref, b_ref, eps):
    """LayerNorm over the last dim of a f32 [rows, E] tile."""
    mu = jnp.mean(y, axis=-1, keepdims=True)
    var = jnp.mean((y - mu) ** 2, axis=-1, keepdims=True)
    yn = (y - mu) * jax.lax.rsqrt(var + eps)
    return yn * g_ref[...].astype(jnp.float32) + b_ref[...].astype(jnp.float32)


# ----------------------------------------------------------------------------
# Kernel 1: tiled linear  y = [relu](x @ W + b)
# ----------------------------------------------------------------------------
def _matmul_kernel(x_ref, w_ref, b_ref, o_ref, acc_ref, *, relu):
    @pl.when(pl.program_id(2) == 0)
    def _():
        acc_ref[...] = jnp.zeros_like(acc_ref)

    acc_ref[...] += jnp.dot(x_ref[...], w_ref[...],
                            preferred_element_type=jnp.float32)

    @pl.when(pl.program_id(2) == pl.num_programs(2) - 1)
    def _():
        r = acc_ref[...] + b_ref[...].astype(jnp.float32)
        if relu:
            r = jnp.maximum(r, 0.0)
        o_ref[...] = r.astype(o_ref.dtype)


def linear(x, w, b, *, relu=False, tm=256, tn=256, tk=512):
    """x: [N, Din], w: [Din, Dout] (pre-transposed), b: [Dout] -> [N, Dout]."""
    N, K = x.shape
    Dout = w.shape[1]
    TM = _pick_tile(N, tm, 8)
    TN = _pick_tile(Dout, tn, 128)
    TK = _pick_tile(K, tk, 128)
    grid = (N // TM, Dout // TN, K // TK)
    kernel = functools.partial(_matmul_kernel, relu=relu)
    return pl.pallas_call(
        kernel,
        out_shape=jax.ShapeDtypeStruct((N, Dout), x.dtype),
        grid=grid,
        in_specs=[
            pl.BlockSpec((TM, TK), lambda i, j, k: (i, k)),
            pl.BlockSpec((TK, TN), lambda i, j, k: (k, j)),
            pl.BlockSpec((1, TN), lambda i, j, k: (0, j)),
        ],
        out_specs=pl.BlockSpec((TM, TN), lambda i, j, k: (i, j)),
        scratch_shapes=[pltpu.VMEM((TM, TN), jnp.float32)],
        compiler_params=_cparams(("parallel", "parallel", "arbitrary")),
    )(x, w, b.reshape(1, Dout))


# ----------------------------------------------------------------------------
# Kernel 2: tiled matmul + residual + LayerNorm epilogue
#   out = LN(residual + x @ W + b)
# ----------------------------------------------------------------------------
def _matmul_res_ln_kernel(x_ref, w_ref, b_ref, res_ref, g_ref, bln_ref,
                          o_ref, acc_ref, *, eps):
    @pl.when(pl.program_id(1) == 0)
    def _():
        acc_ref[...] = jnp.zeros_like(acc_ref)

    acc_ref[...] += jnp.dot(x_ref[...], w_ref[...],
                            preferred_element_type=jnp.float32)

    @pl.when(pl.program_id(1) == pl.num_programs(1) - 1)
    def _():
        y = (acc_ref[...] + b_ref[...].astype(jnp.float32)
             + res_ref[...].astype(jnp.float32))
        o_ref[...] = _ln_rows(y, g_ref, bln_ref, eps).astype(o_ref.dtype)


def matmul_residual_layernorm(x, w, b, residual, gamma, beta,
                              *, tm=256, tk=512, eps=LN_EPS):
    """x: [N,K], w: [K,E], residual: [N,E] -> LN(residual + x@w + b)  [N,E]."""
    N, K = x.shape
    E = w.shape[1]
    TM = _pick_tile(N, tm, 8)
    TK = _pick_tile(K, tk, 128)
    grid = (N // TM, K // TK)
    kernel = functools.partial(_matmul_res_ln_kernel, eps=eps)
    return pl.pallas_call(
        kernel,
        out_shape=jax.ShapeDtypeStruct((N, E), x.dtype),
        grid=grid,
        in_specs=[
            pl.BlockSpec((TM, TK), lambda i, k: (i, k)),
            pl.BlockSpec((TK, E), lambda i, k: (k, 0)),
            pl.BlockSpec((1, E), lambda i, k: (0, 0)),
            pl.BlockSpec((TM, E), lambda i, k: (i, 0)),
            pl.BlockSpec((1, E), lambda i, k: (0, 0)),
            pl.BlockSpec((1, E), lambda i, k: (0, 0)),
        ],
        out_specs=pl.BlockSpec((TM, E), lambda i, k: (i, 0)),
        scratch_shapes=[pltpu.VMEM((TM, E), jnp.float32)],
        compiler_params=_cparams(("parallel", "arbitrary")),
    )(x, w, b.reshape(1, E), residual, gamma.reshape(1, E), beta.reshape(1, E))


# ----------------------------------------------------------------------------
# Kernel 3: fused FFN block   out = LN(x + relu(x@W1+b1) @ W2 + b2)
#   hidden chunk stays in VMEM; FF dim is the (accumulated) reduction axis.
# ----------------------------------------------------------------------------
def _ffn_kernel(x_ref, w1_ref, b1_ref, w2_ref, b2_ref, g_ref, bln_ref,
                o_ref, acc_ref, *, eps):
    @pl.when(pl.program_id(1) == 0)
    def _():
        acc_ref[...] = jnp.zeros_like(acc_ref)

    h = jnp.dot(x_ref[...], w1_ref[...], preferred_element_type=jnp.float32)
    h = jnp.maximum(h + b1_ref[...].astype(jnp.float32), 0.0)
    acc_ref[...] += jnp.dot(h, w2_ref[...].astype(jnp.float32),
                            preferred_element_type=jnp.float32)

    @pl.when(pl.program_id(1) == pl.num_programs(1) - 1)
    def _():
        y = (acc_ref[...] + b2_ref[...].astype(jnp.float32)
             + x_ref[...].astype(jnp.float32))
        o_ref[...] = _ln_rows(y, g_ref, bln_ref, eps).astype(o_ref.dtype)


def ffn_residual_layernorm(x, w1, b1, w2, b2, gamma, beta,
                           *, tm=256, tf=512, eps=LN_EPS):
    """x: [N,E], w1: [E,F], w2: [F,E] -> LN(x + relu(x@w1+b1)@w2 + b2)."""
    N, E = x.shape
    F = w1.shape[1]
    TM = _pick_tile(N, tm, 8)
    TF = _pick_tile(F, tf, 128)
    grid = (N // TM, F // TF)
    kernel = functools.partial(_ffn_kernel, eps=eps)
    return pl.pallas_call(
        kernel,
        out_shape=jax.ShapeDtypeStruct((N, E), x.dtype),
        grid=grid,
        in_specs=[
            pl.BlockSpec((TM, E), lambda i, f: (i, 0)),
            pl.BlockSpec((E, TF), lambda i, f: (0, f)),
            pl.BlockSpec((1, TF), lambda i, f: (0, f)),
            pl.BlockSpec((TF, E), lambda i, f: (f, 0)),
            pl.BlockSpec((1, E), lambda i, f: (0, 0)),
            pl.BlockSpec((1, E), lambda i, f: (0, 0)),
            pl.BlockSpec((1, E), lambda i, f: (0, 0)),
        ],
        out_specs=pl.BlockSpec((TM, E), lambda i, f: (i, 0)),
        scratch_shapes=[pltpu.VMEM((TM, E), jnp.float32)],
        compiler_params=_cparams(("parallel", "arbitrary")),
    )(x, w1, b1.reshape(1, F), w2, b2.reshape(1, E),
      gamma.reshape(1, E), beta.reshape(1, E))


# ----------------------------------------------------------------------------
# Kernel 4: multi-head attention core (one batch element, all heads, per step)
# ----------------------------------------------------------------------------
def _attn_kernel(q_ref, k_ref, v_ref, am_ref, kpm_ref, o_ref):
    # TODO(synk): for long sequences this holds full [H,L,S] scores per step;
    #             a flash-style online-softmax tiling over S would be needed.
    q = q_ref[0].astype(jnp.float32)                       # [H, L, Dh]
    k = k_ref[0].astype(jnp.float32)                       # [H, S, Dh]
    v = v_ref[0].astype(jnp.float32)                       # [H, S, Dh]
    H, L, Dh = q.shape

    # scores: contract last dims, batch over heads (no explicit transpose)
    s = jax.lax.dot_general(q, k, (((2,), (2,)), ((0,), (0,))),
                            preferred_element_type=jnp.float32)   # [H, L, S]
    s = s + am_ref[...][None, :, :] + kpm_ref[0][None, :, :]

    s = s - jnp.max(s, axis=-1, keepdims=True)
    p = jnp.exp(s)
    p = p * pl.reciprocal(jnp.sum(p, axis=-1, keepdims=True), approx=True)

    o = jax.lax.dot_general(p, v, (((2,), (1,)), ((0,), (0,))),
                            preferred_element_type=jnp.float32)   # [H, L, Dh]
    # write heads into a lane-dense [L, H*Dh] output slab
    for h in range(H):
        o_ref[0, :, h * Dh:(h + 1) * Dh] = o[h].astype(o_ref.dtype)


def attention(q, k, v, attn_mask, kpm_add):
    """q: [B,H,L,Dh], k/v: [B,H,S,Dh], attn_mask: [L,S] additive,
    kpm_add: [B,1,S] additive  ->  [B, L, H*Dh]."""
    B, H, L, Dh = q.shape
    S = k.shape[2]
    E = H * Dh
    return pl.pallas_call(
        _attn_kernel,
        out_shape=jax.ShapeDtypeStruct((B, L, E), q.dtype),
        grid=(B,),
        in_specs=[
            pl.BlockSpec((1, H, L, Dh), lambda b: (b, 0, 0, 0)),
            pl.BlockSpec((1, H, S, Dh), lambda b: (b, 0, 0, 0)),
            pl.BlockSpec((1, H, S, Dh), lambda b: (b, 0, 0, 0)),
            pl.BlockSpec((L, S), lambda b: (0, 0)),
            pl.BlockSpec((1, 1, S), lambda b: (b, 0, 0)),
        ],
        out_specs=pl.BlockSpec((1, L, E), lambda b: (b, 0, 0)),
        compiler_params=_cparams(("parallel",)),
    )(q, k, v, attn_mask, kpm_add)


# ----------------------------------------------------------------------------
# Kernel 5: plain LayerNorm (final norm), tiled over rows
# ----------------------------------------------------------------------------
def _ln_kernel(x_ref, g_ref, b_ref, o_ref, *, eps):
    y = x_ref[...].astype(jnp.float32)
    o_ref[...] = _ln_rows(y, g_ref, b_ref, eps).astype(o_ref.dtype)


def layernorm(x3d, gamma, beta, *, tm=256, eps=LN_EPS):
    L, B, E = x3d.shape
    N = L * B
    TM = _pick_tile(N, tm, 8)
    kernel = functools.partial(_ln_kernel, eps=eps)
    out = pl.pallas_call(
        kernel,
        out_shape=jax.ShapeDtypeStruct((N, E), x3d.dtype),
        grid=(N // TM,),
        in_specs=[
            pl.BlockSpec((TM, E), lambda i: (i, 0)),
            pl.BlockSpec((1, E), lambda i: (0, 0)),
            pl.BlockSpec((1, E), lambda i: (0, 0)),
        ],
        out_specs=pl.BlockSpec((TM, E), lambda i: (i, 0)),
        compiler_params=_cparams(("parallel",)),
    )(x3d.reshape(N, E), gamma.reshape(1, E), beta.reshape(1, E))
    return out.reshape(L, B, E)


# ----------------------------------------------------------------------------
# Glue: decoder layer / decoder stack (PyTorch post-norm semantics, dropout=0)
# ----------------------------------------------------------------------------
def _split_heads(x2d, seq, B, H, Dh):
    return x2d.reshape(seq, B, H, Dh).transpose(1, 2, 0, 3)      # [B,H,seq,Dh]


def _additive_attn_mask(attn_mask, L, S):
    if attn_mask is None:
        return jnp.zeros((L, S), jnp.float32)
    return attn_mask.astype(jnp.float32)


def _additive_kpm(kpm, B, S):
    if kpm is None:
        return jnp.zeros((B, 1, S), jnp.float32)
    return jnp.where(kpm[:, None, :], NEG_INF, 0.0).astype(jnp.float32)


def decoder_layer_forward(tgt, memory, p, nhead, tgt_mask, memory_mask,
                          tgt_key_padding_mask, memory_key_padding_mask):
    L, B, E = tgt.shape
    S = memory.shape[0]
    H = nhead
    Dh = E // H

    x2d = tgt.reshape(L * B, E)
    mem2d = memory.reshape(S * B, E)

    # --- self-attention block (fused QKV projection, scale folded into Wq) ---
    qkv = linear(x2d, p["sa_w_qkv"], p["sa_b_qkv"])              # [L*B, 3E]
    q, k, v = jnp.split(qkv, 3, axis=-1)
    q = _split_heads(q, L, B, H, Dh)
    k = _split_heads(k, L, B, H, Dh)
    v = _split_heads(v, L, B, H, Dh)
    am = _additive_attn_mask(tgt_mask, L, L)
    kpm = _additive_kpm(tgt_key_padding_mask, B, L)
    sa = attention(q, k, v, am, kpm)                             # [B, L, E]
    sa2d = sa.transpose(1, 0, 2).reshape(L * B, E)
    x2d = matmul_residual_layernorm(sa2d, p["sa_w_out"], p["sa_b_out"],
                                    x2d, p["ln1_g"], p["ln1_b"])

    # --- cross-attention block (fused K/V projection of memory) ---
    qc = linear(x2d, p["ca_w_q"], p["ca_b_q"])                   # [L*B, E]
    kvc = linear(mem2d, p["ca_w_kv"], p["ca_b_kv"])              # [S*B, 2E]
    kc, vc = jnp.split(kvc, 2, axis=-1)
    qc = _split_heads(qc, L, B, H, Dh)
    kc = _split_heads(kc, S, B, H, Dh)
    vc = _split_heads(vc, S, B, H, Dh)
    amc = _additive_attn_mask(memory_mask, L, S)
    kpmc = _additive_kpm(memory_key_padding_mask, B, S)
    ca = attention(qc, kc, vc, amc, kpmc)                        # [B, L, E]
    ca2d = ca.transpose(1, 0, 2).reshape(L * B, E)
    x2d = matmul_residual_layernorm(ca2d, p["ca_w_out"], p["ca_b_out"],
                                    x2d, p["ln2_g"], p["ln2_b"])

    # --- feed-forward block, fully fused (hidden stays in VMEM) ---
    x2d = ffn_residual_layernorm(x2d, p["w1"], p["b1"], p["w2"], p["b2"],
                                 p["ln3_g"], p["ln3_b"])
    return x2d.reshape(L, B, E)


def my_transformer_decoder(tgt, memory, params, *, nhead, tgt_mask=None,
                           memory_mask=None, tgt_key_padding_mask=None,
                           memory_key_padding_mask=None):
    output = tgt
    for layer_p in params["layers"]:
        output = decoder_layer_forward(output, memory, layer_p, nhead,
                                       tgt_mask, memory_mask,
                                       tgt_key_padding_mask,
                                       memory_key_padding_mask)
    if params.get("norm") is not None:
        g, b = params["norm"]
        output = layernorm(output, g, b)
    return output


# ----------------------------------------------------------------------------
# Deterministic parameter init (torch layout, then one-time pre-transpose /
# fusion / scale-fold, per the perf feedback)
# ----------------------------------------------------------------------------
def _xavier(key, shape):
    fan_in, fan_out = shape[-1], shape[-2]
    limit = jnp.sqrt(6.0 / (fan_in + fan_out))
    return jax.random.uniform(key, shape, jnp.float32, -limit, limit)


def init_params(key, num_layers, d_model, nhead, dim_ff):
    E, F = d_model, dim_ff
    Dh = d_model // nhead
    scale = float(Dh) ** -0.5
    layers = []
    for _ in range(num_layers):
        keys = jax.random.split(key, 7)
        key = keys[0]
        sa_in_w = _xavier(keys[1], (3 * E, E))       # torch in_proj_weight layout
        sa_out_w = _xavier(keys[2], (E, E))
        ca_in_w = _xavier(keys[3], (3 * E, E))
        ca_out_w = _xavier(keys[4], (E, E))
        w1 = _xavier(keys[5], (F, E))
        w2 = _xavier(keys[6], (E, F))
        wq, wk, wv = jnp.split(sa_in_w, 3, axis=0)
        cq, ck, cv = jnp.split(ca_in_w, 3, axis=0)
        zeroE = jnp.zeros((E,), jnp.float32)
        # NOTE: 1/sqrt(Dh) folded into Wq (and its bias, zero at init).
        layers.append({
            "sa_w_qkv": jnp.concatenate([wq.T * scale, wk.T, wv.T], axis=1),
            "sa_b_qkv": jnp.zeros((3 * E,), jnp.float32),
            "sa_w_out": sa_out_w.T, "sa_b_out": zeroE,
            "ca_w_q": cq.T * scale, "ca_b_q": zeroE,
            "ca_w_kv": jnp.concatenate([ck.T, cv.T], axis=1),
            "ca_b_kv": jnp.zeros((2 * E,), jnp.float32),
            "ca_w_out": ca_out_w.T, "ca_b_out": zeroE,
            "w1": w1.T, "b1": jnp.zeros((F,), jnp.float32),
            "w2": w2.T, "b2": zeroE,
            "ln1_g": jnp.ones((E,), jnp.float32), "ln1_b": zeroE,
            "ln2_g": jnp.ones((E,), jnp.float32), "ln2_b": zeroE,
            "ln3_g": jnp.ones((E,), jnp.float32), "ln3_b": zeroE,
        })
    norm = (jnp.ones((E,), jnp.float32), jnp.zeros((E,), jnp.float32))
    return {"layers": layers, "norm": norm}


# ----------------------------------------------------------------------------
# Main
# ----------------------------------------------------------------------------
if __name__ == "__main__":
    tgt_len, src_len, batch, d_model, nhead, dim_ff, num_layers = 8, 8, 2, 32, 4, 64, 2

    root = jax.random.PRNGKey(0)
    k_tgt, k_mem, k_par = jax.random.split(root, 3)

    tgt = jax.random.normal(k_tgt, (tgt_len, batch, d_model), jnp.float32)
    memory = jax.random.normal(k_mem, (src_len, batch, d_model), jnp.float32)

    # causal mask [tgt_len, tgt_len] (additive, like generate_square_subsequent_mask)
    causal = jnp.where(
        jnp.arange(tgt_len)[:, None] >= jnp.arange(tgt_len)[None, :], 0.0, NEG_INF
    ).astype(jnp.float32)
    # key padding masks (True = padded)
    tgt_kpm = jnp.zeros((batch, tgt_len), bool).at[1, -1].set(True)
    mem_kpm = jnp.zeros((batch, src_len), bool).at[0, -2:].set(True)

    params = init_params(k_par, num_layers, d_model, nhead, dim_ff)

    fwd = jax.jit(functools.partial(my_transformer_decoder, nhead=nhead))
    out = fwd(tgt, memory, params,
              tgt_mask=causal, memory_mask=None,
              tgt_key_padding_mask=tgt_kpm,
              memory_key_padding_mask=mem_kpm)
    out = jax.block_until_ready(out)

    assert out.shape == (tgt_len, batch, d_model)
    assert bool(jnp.all(jnp.isfinite(out)))
    print("KERNEL_OK")
</pallas_src>

<mosaic_0001>
module attributes {stable_mosaic.version = 11 : i64} {
  func.func @_matmul_kernel(%arg0: i32, %arg1: i32, %arg2: i32, %arg3: memref<16x32xf32, #tpu.memory_space<vmem>>, %arg4: memref<32x96xf32, #tpu.memory_space<vmem>>, %arg5: memref<1x96xf32, #tpu.memory_space<vmem>>, %arg6: memref<16x96xf32, #tpu.memory_space<vmem>>, %arg7: memref<16x96xf32, #tpu.memory_space<vmem>>) attributes {dimension_semantics = [#tpu.dimension_semantics<parallel>, #tpu.dimension_semantics<parallel>, #tpu.dimension_semantics<arbitrary>], iteration_bounds = array<i64: 1, 1, 1>, scalar_prefetch = 0 : i64, scratch_operands = 1 : i64, tpu.core_type = #tpu.core_type<tc>, window_params = [{transform_indices = @transform_0, window_bounds = array<i64: 16, 32>}, {transform_indices = @transform_1, window_bounds = array<i64: 32, 96>}, {transform_indices = @transform_2, window_bounds = array<i64: 1, 96>}, {transform_indices = @transform_3, window_bounds = array<i64: 16, 96>}]} {
    %c0_i32 = arith.constant 0 : i32
    %0 = arith.cmpi eq, %arg2, %c0_i32 : i32
    %1 = arith.extui %0 : i1 to i32
    %c0_i32_0 = arith.constant 0 : i32
    %2 = arith.cmpi ne, %1, %c0_i32_0 : i32
    scf.if %2 {
      %cst_10 = arith.constant 0.000000e+00 : f32
      %12 = vector.broadcast %cst_10 : f32 to vector<16x96xf32>
      %c0_11 = arith.constant 0 : index
      %c0_12 = arith.constant 0 : index
      %13 = vector.load %arg7[%c0_11, %c0_12] : memref<16x96xf32, #tpu.memory_space<vmem>>, vector<16x96xf32>
      tpu.vector_store %arg7[%c0_11, %c0_12], %12 {strides = array<i32>} : memref<16x96xf32, #tpu.memory_space<vmem>>, vector<16x96xf32>,
    } else {
    }
    %c0 = arith.constant 0 : index
    %c0_1 = arith.constant 0 : index
    %3 = vector.load %arg7[%c0, %c0_1] : memref<16x96xf32, #tpu.memory_space<vmem>>, vector<16x96xf32>
    %c0_2 = arith.constant 0 : index
    %c0_3 = arith.constant 0 : index
    %4 = vector.load %arg3[%c0_2, %c0_3] : memref<16x32xf32, #tpu.memory_space<vmem>>, vector<16x32xf32>
    %c0_4 = arith.constant 0 : index
    %c0_5 = arith.constant 0 : index
    %5 = vector.load %arg4[%c0_4, %c0_5] : memref<32x96xf32, #tpu.memory_space<vmem>>, vector<32x96xf32>
    %cst = arith.constant dense<0.000000e+00> : vector<16x96xf32>
    %6 = tpu.matmul %4, %5, %cst {dimension_numbers = #tpu.dot_dimension_numbers<[1], [0], [0], [1], [0, 0, 1, 1], [], []>} : vector<16x32xf32>, vector<32x96xf32>, vector<16x96xf32> -> vector<16x96xf32>
    %7 = arith.addf %3, %6 : vector<16x96xf32>
    %c0_6 = arith.constant 0 : index
    %c0_7 = arith.constant 0 : index
    %8 = vector.load %arg7[%c0_6, %c0_7] : memref<16x96xf32, #tpu.memory_space<vmem>>, vector<16x96xf32>
    tpu.vector_store %arg7[%c0_6, %c0_7], %7 {strides = array<i32>} : memref<16x96xf32, #tpu.memory_space<vmem>>, vector<16x96xf32>,
    %c0_i32_8 = arith.constant 0 : i32
    %9 = arith.cmpi eq, %arg2, %c0_i32_8 : i32
    %10 = arith.extui %9 : i1 to i32
    %c0_i32_9 = arith.constant 0 : i32
    %11 = arith.cmpi ne, %10, %c0_i32_9 : i32
    scf.if %11 {
      %c0_10 = arith.constant 0 : index
      %c0_11 = arith.constant 0 : index
      %12 = vector.load %arg7[%c0_10, %c0_11] : memref<16x96xf32, #tpu.memory_space<vmem>>, vector<16x96xf32>
      %c0_12 = arith.constant 0 : index
      %c0_13 = arith.constant 0 : index
      %13 = vector.load %arg5[%c0_12, %c0_13] : memref<1x96xf32, #tpu.memory_space<vmem>>, vector<1x96xf32>
      %14 = vector.broadcast %13 : vector<1x96xf32> to vector<16x96xf32>
      %15 = arith.addf %12, %14 : vector<16x96xf32>
      %c0_14 = arith.constant 0 : index
      %c0_15 = arith.constant 0 : index
      %16 = vector.load %arg6[%c0_14, %c0_15] : memref<16x96xf32, #tpu.memory_space<vmem>>, vector<16x96xf32>
      tpu.vector_store %arg6[%c0_14, %c0_15], %15 {strides = array<i32>} : memref<16x96xf32, #tpu.memory_space<vmem>>, vector<16x96xf32>,
    } else {
    }
    return
  }
  func.func @transform_0(%arg0: i32, %arg1: i32, %arg2: i32) -> (i32, i32) {
    %c0_i32 = arith.constant 0 : i32
    return %arg0, %arg2 : i32, i32
  }
  func.func @transform_1(%arg0: i32, %arg1: i32, %arg2: i32) -> (i32, i32) {
    %c0_i32 = arith.constant 0 : i32
    return %arg2, %arg1 : i32, i32
  }
  func.func @transform_2(%arg0: i32, %arg1: i32, %arg2: i32) -> (i32, i32) {
    %c0_i32 = arith.constant 0 : i32
    %c0_i32_0 = arith.constant 0 : i32
    return %c0_i32, %arg1 : i32, i32
  }
  func.func @transform_3(%arg0: i32, %arg1: i32, %arg2: i32) -> (i32, i32) {
    %c0_i32 = arith.constant 0 : i32
    return %arg0, %arg1 : i32, i32
  }
}

module attributes {stable_mosaic.version = 11 : i64} {
  func.func @_attn_kernel(%arg0: i32, %arg1: memref<1x4x8x8xf32, #tpu.memory_space<vmem>>, %arg2: memref<1x4x8x8xf32, #tpu.memory_space<vmem>>, %arg3: memref<1x4x8x8xf32, #tpu.memory_space<vmem>>, %arg4: memref<8x8xf32, #tpu.memory_space<vmem>>, %arg5: memref<1x1x8xf32, #tpu.memory_space<vmem>>, %arg6: memref<1x8x32xf32, #tpu.memory_space<vmem>>) attributes {dimension_semantics = [#tpu.dimension_semantics<parallel>], iteration_bounds = array<i64: 2>, scalar_prefetch = 0 : i64, scratch_operands = 0 : i64, tpu.core_type = #tpu.core_type<tc>, window_params = [{transform_indices = @transform_0, window_bounds = array<i64: 1, 4, 8, 8>}, {transform_indices = @transform_1, window_bounds = array<i64: 1, 4, 8, 8>}, {transform_indices = @transform_2, window_bounds = array<i64: 1, 4, 8, 8>}, {pipeline_mode = #tpu.pipeline_mode<synchronous>, transform_indices = @transform_3, window_bounds = array<i64: 8, 8>}, {transform_indices = @transform_4, window_bounds = array<i64: 1, 1, 8>}, {transform_indices = @transform_5, window_bounds = array<i64: 1, 8, 32>}]} {
    %c0 = arith.constant 0 : index
    %c0_0 = arith.constant 0 : index
    %c0_1 = arith.constant 0 : index
    %c0_2 = arith.constant 0 : index
    %0 = vector.load %arg1[%c0, %c0_0, %c0_1, %c0_2] : memref<1x4x8x8xf32, #tpu.memory_space<vmem>>, vector<1x4x8x8xf32>
    %1 = vector.shape_cast %0 : vector<1x4x8x8xf32> to vector<4x8x8xf32>
    %c0_3 = arith.constant 0 : index
    %c0_4 = arith.constant 0 : index
    %c0_5 = arith.constant 0 : index
    %c0_6 = arith.constant 0 : index
    %2 = vector.load %arg2[%c0_3, %c0_4, %c0_5, %c0_6] : memref<1x4x8x8xf32, #tpu.memory_space<vmem>>, vector<1x4x8x8xf32>
    %3 = vector.shape_cast %2 : vector<1x4x8x8xf32> to vector<4x8x8xf32>
    %c0_7 = arith.constant 0 : index
    %c0_8 = arith.constant 0 : index
    %c0_9 = arith.constant 0 : index
    %c0_10 = arith.constant 0 : index
    %4 = vector.load %arg3[%c0_7, %c0_8, %c0_9, %c0_10] : memref<1x4x8x8xf32, #tpu.memory_space<vmem>>, vector<1x4x8x8xf32>
    %5 = vector.shape_cast %4 : vector<1x4x8x8xf32> to vector<4x8x8xf32>
    %cst = arith.constant dense<0.000000e+00> : vector<4x8x8xf32>
    %6 = tpu.matmul %1, %3, %cst {dimension_numbers = #tpu.dot_dimension_numbers<[2], [2], [1], [1], [0, 0, 0, 1, 1, 1], [0], [0]>} : vector<4x8x8xf32>, vector<4x8x8xf32>, vector<4x8x8xf32> -> vector<4x8x8xf32>
    %c0_11 = arith.constant 0 : index
    %c0_12 = arith.constant 0 : index
    %7 = vector.load %arg4[%c0_11, %c0_12] : memref<8x8xf32, #tpu.memory_space<vmem>>, vector<8x8xf32>
    %8 = vector.shape_cast %7 : vector<8x8xf32> to vector<1x8x8xf32>
    %9 = vector.broadcast %8 : vector<1x8x8xf32> to vector<4x8x8xf32>
    %10 = arith.addf %6, %9 : vector<4x8x8xf32>
    %c0_13 = arith.constant 0 : index
    %c0_14 = arith.constant 0 : index
    %c0_15 = arith.constant 0 : index
    %11 = vector.load %arg5[%c0_13, %c0_14, %c0_15] : memref<1x1x8xf32, #tpu.memory_space<vmem>>, vector<1x1x8xf32>
    %12 = vector.shape_cast %11 : vector<1x1x8xf32> to vector<1x8xf32>
    %13 = vector.shape_cast %12 : vector<1x8xf32> to vector<1x1x8xf32>
    %14 = vector.broadcast %13 : vector<1x1x8xf32> to vector<4x8x8xf32>
    %15 = arith.addf %10, %14 : vector<4x8x8xf32>
    %cst_16 = arith.constant dense<0xFF800000> : vector<4x8xf32>
    %16 = vector.multi_reduction <maximumf>, %15, %cst_16 [2] : vector<4x8x8xf32> to vector<4x8xf32>
    %17 = vector.shape_cast %16 : vector<4x8xf32> to vector<4x8x1xf32>
    %18 = vector.broadcast %17 : vector<4x8x1xf32> to vector<4x8x8xf32>
    %19 = arith.subf %15, %18 : vector<4x8x8xf32>
    %20 = math.exp %19 : vector<4x8x8xf32>
    %cst_17 = arith.constant dense<0.000000e+00> : vector<4x8xf32>
    %21 = vector.multi_reduction <add>, %20, %cst_17 [2] : vector<4x8x8xf32> to vector<4x8xf32>
    %22 = vector.shape_cast %21 : vector<4x8xf32> to vector<4x8x1xf32>
    %23 = tpu.reciprocal %22 {approx = true} : vector<4x8x1xf32> -> vector<4x8x1xf32>
    %24 = vector.broadcast %23 : vector<4x8x1xf32> to vector<4x8x8xf32>
    %25 = arith.mulf %20, %24 : vector<4x8x8xf32>
    %cst_18 = arith.constant dense<0.000000e+00> : vector<4x8x8xf32>
    %26 = tpu.matmul %25, %5, %cst_18 {dimension_numbers = #tpu.dot_dimension_numbers<[2], [1], [1], [2], [0, 0, 0, 1, 1, 2], [0], [0]>} : vector<4x8x8xf32>, vector<4x8x8xf32>, vector<4x8x8xf32> -> vector<4x8x8xf32>
    %27 = vector.extract_strided_slice %26 {offsets = [0, 0, 0], sizes = [1, 8, 8], strides = [1, 1, 1]} : vector<4x8x8xf32> to vector<1x8x8xf32>
    %28 = vector.shape_cast %27 : vector<1x8x8xf32> to vector<8x8xf32>
    %c0_19 = arith.constant 0 : index
    %c0_20 = arith.constant 0 : index
    %c0_21 = arith.constant 0 : index
    %29 = vector.load %arg6[%c0_19, %c0_20, %c0_21] : memref<1x8x32xf32, #tpu.memory_space<vmem>>, vector<1x8x8xf32>
    %30 = vector.shape_cast %29 : vector<1x8x8xf32> to vector<8x8xf32>
    %31 = vector.shape_cast %28 : vector<8x8xf32> to vector<1x8x8xf32>
    tpu.vector_store %arg6[%c0_19, %c0_20, %c0_21], %31 {strides = array<i32>} : memref<1x8x32xf32, #tpu.memory_space<vmem>>, vector<1x8x8xf32>,
    %32 = vector.extract_strided_slice %26 {offsets = [1, 0, 0], sizes = [1, 8, 8], strides = [1, 1, 1]} : vector<4x8x8xf32> to vector<1x8x8xf32>
    %33 = vector.shape_cast %32 : vector<1x8x8xf32> to vector<8x8xf32>
    %c0_22 = arith.constant 0 : index
    %c0_23 = arith.constant 0 : index
    %c8 = arith.constant 8 : index
    %34 = vector.load %arg6[%c0_22, %c0_23, %c8] : memref<1x8x32xf32, #tpu.memory_space<vmem>>, vector<1x8x8xf32>
    %35 = vector.shape_cast %34 : vector<1x8x8xf32> to vector<8x8xf32>
    %36 = vector.shape_cast %33 : vector<8x8xf32> to vector<1x8x8xf32>
    tpu.vector_store %arg6[%c0_22, %c0_23, %c8], %36 {strides = array<i32>} : memref<1x8x32xf32, #tpu.memory_space<vmem>>, vector<1x8x8xf32>,
    %37 = vector.extract_strided_slice %26 {offsets = [2, 0, 0], sizes = [1, 8, 8], strides = [1, 1, 1]} : vector<4x8x8xf32> to vector<1x8x8xf32>
    %38 = vector.shape_cast %37 : vector<1x8x8xf32> to vector<8x8xf32>
    %c0_24 = arith.constant 0 : index
    %c0_25 = arith.constant 0 : index
    %c16 = arith.constant 16 : index
    %39 = vector.load %arg6[%c0_24, %c0_25, %c16] : memref<1x8x32xf32, #tpu.memory_space<vmem>>, vector<1x8x8xf32>
    %40 = vector.shape_cast %39 : vector<1x8x8xf32> to vector<8x8xf32>
    %41 = vector.shape_cast %38 : vector<8x8xf32> to vector<1x8x8xf32>
    tpu.vector_store %arg6[%c0_24, %c0_25, %c16], %41 {strides = array<i32>} : memref<1x8x32xf32, #tpu.memory_space<vmem>>, vector<1x8x8xf32>,
    %42 = vector.extract_strided_slice %26 {offsets = [3, 0, 0], sizes = [1, 8, 8], strides = [1, 1, 1]} : vector<4x8x8xf32> to vector<1x8x8xf32>
    %43 = vector.shape_cast %42 : vector<1x8x8xf32> to vector<8x8xf32>
    %c0_26 = arith.constant 0 : index
    %c0_27 = arith.constant 0 : index
    %c24 = arith.constant 24 : index
    %44 = vector.load %arg6[%c0_26, %c0_27, %c24] : memref<1x8x32xf32, #tpu.memory_space<vmem>>, vector<1x8x8xf32>
    %45 = vector.shape_cast %44 : vector<1x8x8xf32> to vector<8x8xf32>
    %46 = vector.shape_cast %43 : vector<8x8xf32> to vector<1x8x8xf32>
    tpu.vector_store %arg6[%c0_26, %c0_27, %c24], %46 {strides = array<i32>} : memref<1x8x32xf32, #tpu.memory_space<vmem>>, vector<1x8x8xf32>,
    return
  }
  func.func @transform_0(%arg0: i32) -> (i32, i32, i32, i32) {
    %c0_i32 = arith.constant 0 : i32
    %c0_i32_0 = arith.constant 0 : i32
    %c0_i32_1 = arith.constant 0 : i32
    %c0_i32_2 = arith.constant 0 : i32
    return %arg0, %c0_i32, %c0_i32_0, %c0_i32_1 : i32, i32, i32, i32
  }
  func.func @transform_1(%arg0: i32) -> (i32, i32, i32, i32) {
    %c0_i32 = arith.constant 0 : i32
    %c0_i32_0 = arith.constant 0 : i32
    %c0_i32_1 = arith.constant 0 : i32
    %c0_i32_2 = arith.constant 0 : i32
    return %arg0, %c0_i32, %c0_i32_0, %c0_i32_1 : i32, i32, i32, i32
  }
  func.func @transform_2(%arg0: i32) -> (i32, i32, i32, i32) {
    %c0_i32 = arith.constant 0 : i32
    %c0_i32_0 = arith.constant 0 : i32
    %c0_i32_1 = arith.constant 0 : i32
    %c0_i32_2 = arith.constant 0 : i32
    return %arg0, %c0_i32, %c0_i32_0, %c0_i32_1 : i32, i32, i32, i32
  }
  func.func @transform_3(%arg0: i32) -> (i32, i32) {
    %c0_i32 = arith.constant 0 : i32
    %c0_i32_0 = arith.constant 0 : i32
    %c0_i32_1 = arith.constant 0 : i32
    return %c0_i32, %c0_i32_0 : i32, i32
  }
  func.func @transform_4(%arg0: i32) -> (i32, i32, i32) {
    %c0_i32 = arith.constant 0 : i32
    %c0_i32_0 = arith.constant 0 : i32
    %c0_i32_1 = arith.constant 0 : i32
    return %arg0, %c0_i32, %c0_i32_0 : i32, i32, i32
  }
  func.func @transform_5(%arg0: i32) -> (i32, i32, i32) {
    %c0_i32 = arith.constant 0 : i32
    %c0_i32_0 = arith.constant 0 : i32
    %c0_i32_1 = arith.constant 0 : i32
    return %arg0, %c0_i32, %c0_i32_0 : i32, i32, i32
  }
}

module attributes {stable_mosaic.version = 11 : i64} {
  func.func @_matmul_res_ln_kernel(%arg0: i32, %arg1: i32, %arg2: memref<16x32xf32, #tpu.memory_space<vmem>>, %arg3: memref<32x32xf32, #tpu.memory_space<vmem>>, %arg4: memref<1x32xf32, #tpu.memory_space<vmem>>, %arg5: memref<16x32xf32, #tpu.memory_space<vmem>>, %arg6: memref<1x32xf32, #tpu.memory_space<vmem>>, %arg7: memref<1x32xf32, #tpu.memory_space<vmem>>, %arg8: memref<16x32xf32, #tpu.memory_space<vmem>>, %arg9: memref<16x32xf32, #tpu.memory_space<vmem>>) attributes {dimension_semantics = [#tpu.dimension_semantics<parallel>, #tpu.dimension_semantics<arbitrary>], iteration_bounds = array<i64: 1, 1>, scalar_prefetch = 0 : i64, scratch_operands = 1 : i64, tpu.core_type = #tpu.core_type<tc>, window_params = [{transform_indices = @transform_0, window_bounds = array<i64: 16, 32>}, {transform_indices = @transform_1, window_bounds = array<i64: 32, 32>}, {pipeline_mode = #tpu.pipeline_mode<synchronous>, transform_indices = @transform_2, window_bounds = array<i64: 1, 32>}, {transform_indices = @transform_3, window_bounds = array<i64: 16, 32>}, {pipeline_mode = #tpu.pipeline_mode<synchronous>, transform_indices = @transform_4, window_bounds = array<i64: 1, 32>}, {pipeline_mode = #tpu.pipeline_mode<synchronous>, transform_indices = @transform_5, window_bounds = array<i64: 1, 32>}, {transform_indices = @transform_6, window_bounds = array<i64: 16, 32>}]} {
    %c0_i32 = arith.constant 0 : i32
    %0 = arith.cmpi eq, %arg1, %c0_i32 : i32
    %1 = arith.extui %0 : i1 to i32
    %c0_i32_0 = arith.constant 0 : i32
    %2 = arith.cmpi ne, %1, %c0_i32_0 : i32
    scf.if %2 {
      %cst_10 = arith.constant 0.000000e+00 : f32
      %12 = vector.broadcast %cst_10 : f32 to vector<16x32xf32>
      %c0_11 = arith.constant 0 : index
      %c0_12 = arith.constant 0 : index
      %13 = vector.load %arg9[%c0_11, %c0_12] : memref<16x32xf32, #tpu.memory_space<vmem>>, vector<16x32xf32>
      tpu.vector_store %arg9[%c0_11, %c0_12], %12 {strides = array<i32>} : memref<16x32xf32, #tpu.memory_space<vmem>>, vector<16x32xf32>,
    } else {
    }
    %c0 = arith.constant 0 : index
    %c0_1 = arith.constant 0 : index
    %3 = vector.load %arg9[%c0, %c0_1] : memref<16x32xf32, #tpu.memory_space<vmem>>, vector<16x32xf32>
    %c0_2 = arith.constant 0 : index
    %c0_3 = arith.constant 0 : index
    %4 = vector.load %arg2[%c0_2, %c0_3] : memref<16x32xf32, #tpu.memory_space<vmem>>, vector<16x32xf32>
    %c0_4 = arith.constant 0 : index
    %c0_5 = arith.constant 0 : index
    %5 = vector.load %arg3[%c0_4, %c0_5] : memref<32x32xf32, #tpu.memory_space<vmem>>, vector<32x32xf32>
    %cst = arith.constant dense<0.000000e+00> : vector<16x32xf32>
    %6 = tpu.matmul %4, %5, %cst {dimension_numbers = #tpu.dot_dimension_numbers<[1], [0], [0], [1], [0, 0, 1, 1], [], []>} : vector<16x32xf32>, vector<32x32xf32>, vector<16x32xf32> -> vector<16x32xf32>
    %7 = arith.addf %3, %6 : vector<16x32xf32>
    %c0_6 = arith.constant 0 : index
    %c0_7 = arith.constant 0 : index
    %8 = vector.load %arg9[%c0_6, %c0_7] : memref<16x32xf32, #tpu.memory_space<vmem>>, vector<16x32xf32>
    tpu.vector_store %arg9[%c0_6, %c0_7], %7 {strides = array<i32>} : memref<16x32xf32, #tpu.memory_space<vmem>>, vector<16x32xf32>,
    %c0_i32_8 = arith.constant 0 : i32
    %9 = arith.cmpi eq, %arg1, %c0_i32_8 : i32
    %10 = arith.extui %9 : i1 to i32
    %c0_i32_9 = arith.constant 0 : i32
    %11 = arith.cmpi ne, %10, %c0_i32_9 : i32
    scf.if %11 {
      %c0_10 = arith.constant 0 : index
      %c0_11 = arith.constant 0 : index
      %12 = vector.load %arg9[%c0_10, %c0_11] : memref<16x32xf32, #tpu.memory_space<vmem>>, vector<16x32xf32>
      %c0_12 = arith.constant 0 : index
      %c0_13 = arith.constant 0 : index
      %13 = vector.load %arg4[%c0_12, %c0_13] : memref<1x32xf32, #tpu.memory_space<vmem>>, vector<1x32xf32>
      %14 = vector.broadcast %13 : vector<1x32xf32> to vector<16x32xf32>
      %15 = arith.addf %12, %14 : vector<16x32xf32>
      %c0_14 = arith.constant 0 : index
      %c0_15 = arith.constant 0 : index
      %16 = vector.load %arg5[%c0_14, %c0_15] : memref<16x32xf32, #tpu.memory_space<vmem>>, vector<16x32xf32>
      %17 = arith.addf %15, %16 : vector<16x32xf32>
      %cst_16 = arith.constant dense<0.000000e+00> : vector<16xf32>
      %18 = vector.multi_reduction <add>, %17, %cst_16 [1] : vector<16x32xf32> to vector<16xf32>
      %19 = vector.shape_cast %18 : vector<16xf32> to vector<16x1xf32>
      %cst_17 = arith.constant 3.200000e+01 : f32
      %20 = vector.broadcast %cst_17 : f32 to vector<16x1xf32>
      %21 = arith.divf %19, %20 : vector<16x1xf32>
      %22 = vector.broadcast %21 : vector<16x1xf32> to vector<16x32xf32>
      %23 = arith.subf %17, %22 : vector<16x32xf32>
      %24 = arith.mulf %23, %23 : vector<16x32xf32>
      %cst_18 = arith.constant dense<0.000000e+00> : vector<16xf32>
      %25 = vector.multi_reduction <add>, %24, %cst_18 [1] : vector<16x32xf32> to vector<16xf32>
      %26 = vector.shape_cast %25 : vector<16xf32> to vector<16x1xf32>
      %cst_19 = arith.constant 3.200000e+01 : f32
      %27 = vector.broadcast %cst_19 : f32 to vector<16x1xf32>
      %28 = arith.divf %26, %27 : vector<16x1xf32>
      %29 = vector.broadcast %21 : vector<16x1xf32> to vector<16x32xf32>
      %30 = arith.subf %17, %29 : vector<16x32xf32>
      %cst_20 = arith.constant 9.99999974E-6 : f32
      %31 = vector.broadcast %cst_20 : f32 to vector<16x1xf32>
      %32 = arith.addf %28, %31 : vector<16x1xf32>
      %33 = math.rsqrt %32 : vector<16x1xf32>
      %34 = vector.broadcast %33 : vector<16x1xf32> to vector<16x32xf32>
      %35 = arith.mulf %30, %34 : vector<16x32xf32>
      %c0_21 = arith.constant 0 : index
      %c0_22 = arith.constant 0 : index
      %36 = vector.load %arg6[%c0_21, %c0_22] : memref<1x32xf32, #tpu.memory_space<vmem>>, vector<1x32xf32>
      %37 = vector.broadcast %36 : vector<1x32xf32> to vector<16x32xf32>
      %38 = arith.mulf %35, %37 : vector<16x32xf32>
      %c0_23 = arith.constant 0 : index
      %c0_24 = arith.constant 0 : index
      %39 = vector.load %arg7[%c0_23, %c0_24] : memref<1x32xf32, #tpu.memory_space<vmem>>, vector<1x32xf32>
      %40 = vector.broadcast %39 : vector<1x32xf32> to vector<16x32xf32>
      %41 = arith.addf %38, %40 : vector<16x32xf32>
      %c0_25 = arith.constant 0 : index
      %c0_26 = arith.constant 0 : index
      %42 = vector.load %arg8[%c0_25, %c0_26] : memref<16x32xf32, #tpu.memory_space<vmem>>, vector<16x32xf32>
      tpu.vector_store %arg8[%c0_25, %c0_26], %41 {strides = array<i32>} : memref<16x32xf32, #tpu.memory_space<vmem>>, vector<16x32xf32>,
    } else {
    }
    return
  }
  func.func @transform_0(%arg0: i32, %arg1: i32) -> (i32, i32) {
    %c0_i32 = arith.constant 0 : i32
    return %arg0, %arg1 : i32, i32
  }
  func.func @transform_1(%arg0: i32, %arg1: i32) -> (i32, i32) {
    %c0_i32 = arith.constant 0 : i32
    %c0_i32_0 = arith.constant 0 : i32
    return %arg1, %c0_i32 : i32, i32
  }
  func.func @transform_2(%arg0: i32, %arg1: i32) -> (i32, i32) {
    %c0_i32 = arith.constant 0 : i32
    %c0_i32_0 = arith.constant 0 : i32
    %c0_i32_1 = arith.constant 0 : i32
    return %c0_i32, %c0_i32_0 : i32, i32
  }
  func.func @transform_3(%arg0: i32, %arg1: i32) -> (i32, i32) {
    %c0_i32 = arith.constant 0 : i32
    %c0_i32_0 = arith.constant 0 : i32
    return %arg0, %c0_i32 : i32, i32
  }
  func.func @transform_4(%arg0: i32, %arg1: i32) -> (i32, i32) {
    %c0_i32 = arith.constant 0 : i32
    %c0_i32_0 = arith.constant 0 : i32
    %c0_i32_1 = arith.constant 0 : i32
    return %c0_i32, %c0_i32_0 : i32, i32
  }
  func.func @transform_5(%arg0: i32, %arg1: i32) -> (i32, i32) {
    %c0_i32 = arith.constant 0 : i32
    %c0_i32_0 = arith.constant 0 : i32
    %c0_i32_1 = arith.constant 0 : i32
    return %c0_i32, %c0_i32_0 : i32, i32
  }
  func.func @transform_6(%arg0: i32, %arg1: i32) -> (i32, i32) {
    %c0_i32 = arith.constant 0 : i32
    %c0_i32_0 = arith.constant 0 : i32
    return %arg0, %c0_i32 : i32, i32
  }
}

module attributes {stable_mosaic.version = 11 : i64} {
  func.func @_matmul_kernel(%arg0: i32, %arg1: i32, %arg2: i32, %arg3: memref<16x32xf32, #tpu.memory_space<vmem>>, %arg4: memref<32x32xf32, #tpu.memory_space<vmem>>, %arg5: memref<1x32xf32, #tpu.memory_space<vmem>>, %arg6: memref<16x32xf32, #tpu.memory_space<vmem>>, %arg7: memref<16x32xf32, #tpu.memory_space<vmem>>) attributes {dimension_semantics = [#tpu.dimension_semantics<parallel>, #tpu.dimension_semantics<parallel>, #tpu.dimension_semantics<arbitrary>], iteration_bounds = array<i64: 1, 1, 1>, scalar_prefetch = 0 : i64, scratch_operands = 1 : i64, tpu.core_type = #tpu.core_type<tc>, window_params = [{transform_indices = @transform_0, window_bounds = array<i64: 16, 32>}, {transform_indices = @transform_1, window_bounds = array<i64: 32, 32>}, {transform_indices = @transform_2, window_bounds = array<i64: 1, 32>}, {transform_indices = @transform_3, window_bounds = array<i64: 16, 32>}]} {
    %c0_i32 = arith.constant 0 : i32
    %0 = arith.cmpi eq, %arg2, %c0_i32 : i32
    %1 = arith.extui %0 : i1 to i32
    %c0_i32_0 = arith.constant 0 : i32
    %2 = arith.cmpi ne, %1, %c0_i32_0 : i32
    scf.if %2 {
      %cst_10 = arith.constant 0.000000e+00 : f32
      %12 = vector.broadcast %cst_10 : f32 to vector<16x32xf32>
      %c0_11 = arith.constant 0 : index
      %c0_12 = arith.constant 0 : index
      %13 = vector.load %arg7[%c0_11, %c0_12] : memref<16x32xf32, #tpu.memory_space<vmem>>, vector<16x32xf32>
      tpu.vector_store %arg7[%c0_11, %c0_12], %12 {strides = array<i32>} : memref<16x32xf32, #tpu.memory_space<vmem>>, vector<16x32xf32>,
    } else {
    }
    %c0 = arith.constant 0 : index
    %c0_1 = arith.constant 0 : index
    %3 = vector.load %arg7[%c0, %c0_1] : memref<16x32xf32, #tpu.memory_space<vmem>>, vector<16x32xf32>
    %c0_2 = arith.constant 0 : index
    %c0_3 = arith.constant 0 : index
    %4 = vector.load %arg3[%c0_2, %c0_3] : memref<16x32xf32, #tpu.memory_space<vmem>>, vector<16x32xf32>
    %c0_4 = arith.constant 0 : index
    %c0_5 = arith.constant 0 : index
    %5 = vector.load %arg4[%c0_4, %c0_5] : memref<32x32xf32, #tpu.memory_space<vmem>>, vector<32x32xf32>
    %cst = arith.constant dense<0.000000e+00> : vector<16x32xf32>
    %6 = tpu.matmul %4, %5, %cst {dimension_numbers = #tpu.dot_dimension_numbers<[1], [0], [0], [1], [0, 0, 1, 1], [], []>} : vector<16x32xf32>, vector<32x32xf32>, vector<16x32xf32> -> vector<16x32xf32>
    %7 = arith.addf %3, %6 : vector<16x32xf32>
    %c0_6 = arith.constant 0 : index
    %c0_7 = arith.constant 0 : index
    %8 = vector.load %arg7[%c0_6, %c0_7] : memref<16x32xf32, #tpu.memory_space<vmem>>, vector<16x32xf32>
    tpu.vector_store %arg7[%c0_6, %c0_7], %7 {strides = array<i32>} : memref<16x32xf32, #tpu.memory_space<vmem>>, vector<16x32xf32>,
    %c0_i32_8 = arith.constant 0 : i32
    %9 = arith.cmpi eq, %arg2, %c0_i32_8 : i32
    %10 = arith.extui %9 : i1 to i32
    %c0_i32_9 = arith.constant 0 : i32
    %11 = arith.cmpi ne, %10, %c0_i32_9 : i32
    scf.if %11 {
      %c0_10 = arith.constant 0 : index
      %c0_11 = arith.constant 0 : index
      %12 = vector.load %arg7[%c0_10, %c0_11] : memref<16x32xf32, #tpu.memory_space<vmem>>, vector<16x32xf32>
      %c0_12 = arith.constant 0 : index
      %c0_13 = arith.constant 0 : index
      %13 = vector.load %arg5[%c0_12, %c0_13] : memref<1x32xf32, #tpu.memory_space<vmem>>, vector<1x32xf32>
      %14 = vector.broadcast %13 : vector<1x32xf32> to vector<16x32xf32>
      %15 = arith.addf %12, %14 : vector<16x32xf32>
      %c0_14 = arith.constant 0 : index
      %c0_15 = arith.constant 0 : index
      %16 = vector.load %arg6[%c0_14, %c0_15] : memref<16x32xf32, #tpu.memory_space<vmem>>, vector<16x32xf32>
      tpu.vector_store %arg6[%c0_14, %c0_15], %15 {strides = array<i32>} : memref<16x32xf32, #tpu.memory_space<vmem>>, vector<16x32xf32>,
    } else {
    }
    return
  }
  func.func @transform_0(%arg0: i32, %arg1: i32, %arg2: i32) -> (i32, i32) {
    %c0_i32 = arith.constant 0 : i32
    return %arg0, %arg2 : i32, i32
  }
  func.func @transform_1(%arg0: i32, %arg1: i32, %arg2: i32) -> (i32, i32) {
    %c0_i32 = arith.constant 0 : i32
    return %arg2, %arg1 : i32, i32
  }
  func.func @transform_2(%arg0: i32, %arg1: i32, %arg2: i32) -> (i32, i32) {
    %c0_i32 = arith.constant 0 : i32
    %c0_i32_0 = arith.constant 0 : i32
    return %c0_i32, %arg1 : i32, i32
  }
  func.func @transform_3(%arg0: i32, %arg1: i32, %arg2: i32) -> (i32, i32) {
    %c0_i32 = arith.constant 0 : i32
    return %arg0, %arg1 : i32, i32
  }
}

module attributes {stable_mosaic.version = 11 : i64} {
  func.func @_matmul_kernel(%arg0: i32, %arg1: i32, %arg2: i32, %arg3: memref<16x32xf32, #tpu.memory_space<vmem>>, %arg4: memref<32x64xf32, #tpu.memory_space<vmem>>, %arg5: memref<1x64xf32, #tpu.memory_space<vmem>>, %arg6: memref<16x64xf32, #tpu.memory_space<vmem>>, %arg7: memref<16x64xf32, #tpu.memory_space<vmem>>) attributes {dimension_semantics = [#tpu.dimension_semantics<parallel>, #tpu.dimension_semantics<parallel>, #tpu.dimension_semantics<arbitrary>], iteration_bounds = array<i64: 1, 1, 1>, scalar_prefetch = 0 : i64, scratch_operands = 1 : i64, tpu.core_type = #tpu.core_type<tc>, window_params = [{transform_indices = @transform_0, window_bounds = array<i64: 16, 32>}, {transform_indices = @transform_1, window_bounds = array<i64: 32, 64>}, {transform_indices = @transform_2, window_bounds = array<i64: 1, 64>}, {transform_indices = @transform_3, window_bounds = array<i64: 16, 64>}]} {
    %c0_i32 = arith.constant 0 : i32
    %0 = arith.cmpi eq, %arg2, %c0_i32 : i32
    %1 = arith.extui %0 : i1 to i32
    %c0_i32_0 = arith.constant 0 : i32
    %2 = arith.cmpi ne, %1, %c0_i32_0 : i32
    scf.if %2 {
      %cst_10 = arith.constant 0.000000e+00 : f32
      %12 = vector.broadcast %cst_10 : f32 to vector<16x64xf32>
      %c0_11 = arith.constant 0 : index
      %c0_12 = arith.constant 0 : index
      %13 = vector.load %arg7[%c0_11, %c0_12] : memref<16x64xf32, #tpu.memory_space<vmem>>, vector<16x64xf32>
      tpu.vector_store %arg7[%c0_11, %c0_12], %12 {strides = array<i32>} : memref<16x64xf32, #tpu.memory_space<vmem>>, vector<16x64xf32>,
    } else {
    }
    %c0 = arith.constant 0 : index
    %c0_1 = arith.constant 0 : index
    %3 = vector.load %arg7[%c0, %c0_1] : memref<16x64xf32, #tpu.memory_space<vmem>>, vector<16x64xf32>
    %c0_2 = arith.constant 0 : index
    %c0_3 = arith.constant 0 : index
    %4 = vector.load %arg3[%c0_2, %c0_3] : memref<16x32xf32, #tpu.memory_space<vmem>>, vector<16x32xf32>
    %c0_4 = arith.constant 0 : index
    %c0_5 = arith.constant 0 : index
    %5 = vector.load %arg4[%c0_4, %c0_5] : memref<32x64xf32, #tpu.memory_space<vmem>>, vector<32x64xf32>
    %cst = arith.constant dense<0.000000e+00> : vector<16x64xf32>
    %6 = tpu.matmul %4, %5, %cst {dimension_numbers = #tpu.dot_dimension_numbers<[1], [0], [0], [1], [0, 0, 1, 1], [], []>} : vector<16x32xf32>, vector<32x64xf32>, vector<16x64xf32> -> vector<16x64xf32>
    %7 = arith.addf %3, %6 : vector<16x64xf32>
    %c0_6 = arith.constant 0 : index
    %c0_7 = arith.constant 0 : index
    %8 = vector.load %arg7[%c0_6, %c0_7] : memref<16x64xf32, #tpu.memory_space<vmem>>, vector<16x64xf32>
    tpu.vector_store %arg7[%c0_6, %c0_7], %7 {strides = array<i32>} : memref<16x64xf32, #tpu.memory_space<vmem>>, vector<16x64xf32>,
    %c0_i32_8 = arith.constant 0 : i32
    %9 = arith.cmpi eq, %arg2, %c0_i32_8 : i32
    %10 = arith.extui %9 : i1 to i32
    %c0_i32_9 = arith.constant 0 : i32
    %11 = arith.cmpi ne, %10, %c0_i32_9 : i32
    scf.if %11 {
      %c0_10 = arith.constant 0 : index
      %c0_11 = arith.constant 0 : index
      %12 = vector.load %arg7[%c0_10, %c0_11] : memref<16x64xf32, #tpu.memory_space<vmem>>, vector<16x64xf32>
      %c0_12 = arith.constant 0 : index
      %c0_13 = arith.constant 0 : index
      %13 = vector.load %arg5[%c0_12, %c0_13] : memref<1x64xf32, #tpu.memory_space<vmem>>, vector<1x64xf32>
      %14 = vector.broadcast %13 : vector<1x64xf32> to vector<16x64xf32>
      %15 = arith.addf %12, %14 : vector<16x64xf32>
      %c0_14 = arith.constant 0 : index
      %c0_15 = arith.constant 0 : index
      %16 = vector.load %arg6[%c0_14, %c0_15] : memref<16x64xf32, #tpu.memory_space<vmem>>, vector<16x64xf32>
      tpu.vector_store %arg6[%c0_14, %c0_15], %15 {strides = array<i32>} : memref<16x64xf32, #tpu.memory_space<vmem>>, vector<16x64xf32>,
    } else {
    }
    return
  }
  func.func @transform_0(%arg0: i32, %arg1: i32, %arg2: i32) -> (i32, i32) {
    %c0_i32 = arith.constant 0 : i32
    return %arg0, %arg2 : i32, i32
  }
  func.func @transform_1(%arg0: i32, %arg1: i32, %arg2: i32) -> (i32, i32) {
    %c0_i32 = arith.constant 0 : i32
    return %arg2, %arg1 : i32, i32
  }
  func.func @transform_2(%arg0: i32, %arg1: i32, %arg2: i32) -> (i32, i32) {
    %c0_i32 = arith.constant 0 : i32
    %c0_i32_0 = arith.constant 0 : i32
    return %c0_i32, %arg1 : i32, i32
  }
  func.func @transform_3(%arg0: i32, %arg1: i32, %arg2: i32) -> (i32, i32) {
    %c0_i32 = arith.constant 0 : i32
    return %arg0, %arg1 : i32, i32
  }
}

module attributes {stable_mosaic.version = 11 : i64} {
  func.func @_ffn_kernel(%arg0: i32, %arg1: i32, %arg2: memref<16x32xf32, #tpu.memory_space<vmem>>, %arg3: memref<32x64xf32, #tpu.memory_space<vmem>>, %arg4: memref<1x64xf32, #tpu.memory_space<vmem>>, %arg5: memref<64x32xf32, #tpu.memory_space<vmem>>, %arg6: memref<1x32xf32, #tpu.memory_space<vmem>>, %arg7: memref<1x32xf32, #tpu.memory_space<vmem>>, %arg8: memref<1x32xf32, #tpu.memory_space<vmem>>, %arg9: memref<16x32xf32, #tpu.memory_space<vmem>>, %arg10: memref<16x32xf32, #tpu.memory_space<vmem>>) attributes {dimension_semantics = [#tpu.dimension_semantics<parallel>, #tpu.dimension_semantics<arbitrary>], iteration_bounds = array<i64: 1, 1>, scalar_prefetch = 0 : i64, scratch_operands = 1 : i64, tpu.core_type = #tpu.core_type<tc>, window_params = [{transform_indices = @transform_0, window_bounds = array<i64: 16, 32>}, {transform_indices = @transform_1, window_bounds = array<i64: 32, 64>}, {transform_indices = @transform_2, window_bounds = array<i64: 1, 64>}, {transform_indices = @transform_3, window_bounds = array<i64: 64, 32>}, {pipeline_mode = #tpu.pipeline_mode<synchronous>, transform_indices = @transform_4, window_bounds = array<i64: 1, 32>}, {pipeline_mode = #tpu.pipeline_mode<synchronous>, transform_indices = @transform_5, window_bounds = array<i64: 1, 32>}, {pipeline_mode = #tpu.pipeline_mode<synchronous>, transform_indices = @transform_6, window_bounds = array<i64: 1, 32>}, {transform_indices = @transform_7, window_bounds = array<i64: 16, 32>}]} {
    %c0_i32 = arith.constant 0 : i32
    %0 = arith.cmpi eq, %arg1, %c0_i32 : i32
    %1 = arith.extui %0 : i1 to i32
    %c0_i32_0 = arith.constant 0 : i32
    %2 = arith.cmpi ne, %1, %c0_i32_0 : i32
    scf.if %2 {
      %cst_16 = arith.constant 0.000000e+00 : f32
      %19 = vector.broadcast %cst_16 : f32 to vector<16x32xf32>
      %c0_17 = arith.constant 0 : index
      %c0_18 = arith.constant 0 : index
      %20 = vector.load %arg10[%c0_17, %c0_18] : memref<16x32xf32, #tpu.memory_space<vmem>>, vector<16x32xf32>
      tpu.vector_store %arg10[%c0_17, %c0_18], %19 {strides = array<i32>} : memref<16x32xf32, #tpu.memory_space<vmem>>, vector<16x32xf32>,
    } else {
    }
    %c0 = arith.constant 0 : index
    %c0_1 = arith.constant 0 : index
    %3 = vector.load %arg2[%c0, %c0_1] : memref<16x32xf32, #tpu.memory_space<vmem>>, vector<16x32xf32>
    %c0_2 = arith.constant 0 : index
    %c0_3 = arith.constant 0 : index
    %4 = vector.load %arg3[%c0_2, %c0_3] : memref<32x64xf32, #tpu.memory_space<vmem>>, vector<32x64xf32>
    %cst = arith.constant dense<0.000000e+00> : vector<16x64xf32>
    %5 = tpu.matmul %3, %4, %cst {dimension_numbers = #tpu.dot_dimension_numbers<[1], [0], [0], [1], [0, 0, 1, 1], [], []>} : vector<16x32xf32>, vector<32x64xf32>, vector<16x64xf32> -> vector<16x64xf32>
    %c0_4 = arith.constant 0 : index
    %c0_5 = arith.constant 0 : index
    %6 = vector.load %arg4[%c0_4, %c0_5] : memref<1x64xf32, #tpu.memory_space<vmem>>, vector<1x64xf32>
    %7 = vector.broadcast %6 : vector<1x64xf32> to vector<16x64xf32>
    %8 = arith.addf %5, %7 : vector<16x64xf32>
    %cst_6 = arith.constant 0.000000e+00 : f32
    %9 = vector.broadcast %cst_6 : f32 to vector<16x64xf32>
    %10 = arith.maximumf %8, %9 : vector<16x64xf32>
    %c0_7 = arith.constant 0 : index
    %c0_8 = arith.constant 0 : index
    %11 = vector.load %arg10[%c0_7, %c0_8] : memref<16x32xf32, #tpu.memory_space<vmem>>, vector<16x32xf32>
    %c0_9 = arith.constant 0 : index
    %c0_10 = arith.constant 0 : index
    %12 = vector.load %arg5[%c0_9, %c0_10] : memref<64x32xf32, #tpu.memory_space<vmem>>, vector<64x32xf32>
    %cst_11 = arith.constant dense<0.000000e+00> : vector<16x32xf32>
    %13 = tpu.matmul %10, %12, %cst_11 {dimension_numbers = #tpu.dot_dimension_numbers<[1], [0], [0], [1], [0, 0, 1, 1], [], []>} : vector<16x64xf32>, vector<64x32xf32>, vector<16x32xf32> -> vector<16x32xf32>
    %14 = arith.addf %11, %13 : vector<16x32xf32>
    %c0_12 = arith.constant 0 : index
    %c0_13 = arith.constant 0 : index
    %15 = vector.load %arg10[%c0_12, %c0_13] : memref<16x32xf32, #tpu.memory_space<vmem>>, vector<16x32xf32>
    tpu.vector_store %arg10[%c0_12, %c0_13], %14 {strides = array<i32>} : memref<16x32xf32, #tpu.memory_space<vmem>>, vector<16x32xf32>,
    %c0_i32_14 = arith.constant 0 : i32
    %16 = arith.cmpi eq, %arg1, %c0_i32_14 : i32
    %17 = arith.extui %16 : i1 to i32
    %c0_i32_15 = arith.constant 0 : i32
    %18 = arith.cmpi ne, %17, %c0_i32_15 : i32
    scf.if %18 {
      %c0_16 = arith.constant 0 : index
      %c0_17 = arith.constant 0 : index
      %19 = vector.load %arg10[%c0_16, %c0_17] : memref<16x32xf32, #tpu.memory_space<vmem>>, vector<16x32xf32>
      %c0_18 = arith.constant 0 : index
      %c0_19 = arith.constant 0 : index
      %20 = vector.load %arg6[%c0_18, %c0_19] : memref<1x32xf32, #tpu.memory_space<vmem>>, vector<1x32xf32>
      %21 = vector.broadcast %20 : vector<1x32xf32> to vector<16x32xf32>
      %22 = arith.addf %19, %21 : vector<16x32xf32>
      %c0_20 = arith.constant 0 : index
      %c0_21 = arith.constant 0 : index
      %23 = vector.load %arg2[%c0_20, %c0_21] : memref<16x32xf32, #tpu.memory_space<vmem>>, vector<16x32xf32>
      %24 = arith.addf %22, %23 : vector<16x32xf32>
      %cst_22 = arith.constant dense<0.000000e+00> : vector<16xf32>
      %25 = vector.multi_reduction <add>, %24, %cst_22 [1] : vector<16x32xf32> to vector<16xf32>
      %26 = vector.shape_cast %25 : vector<16xf32> to vector<16x1xf32>
      %cst_23 = arith.constant 3.200000e+01 : f32
      %27 = vector.broadcast %cst_23 : f32 to vector<16x1xf32>
      %28 = arith.divf %26, %27 : vector<16x1xf32>
      %29 = vector.broadcast %28 : vector<16x1xf32> to vector<16x32xf32>
      %30 = arith.subf %24, %29 : vector<16x32xf32>
      %31 = arith.mulf %30, %30 : vector<16x32xf32>
      %cst_24 = arith.constant dense<0.000000e+00> : vector<16xf32>
      %32 = vector.multi_reduction <add>, %31, %cst_24 [1] : vector<16x32xf32> to vector<16xf32>
      %33 = vector.shape_cast %32 : vector<16xf32> to vector<16x1xf32>
      %cst_25 = arith.constant 3.200000e+01 : f32
      %34 = vector.broadcast %cst_25 : f32 to vector<16x1xf32>
      %35 = arith.divf %33, %34 : vector<16x1xf32>
      %36 = vector.broadcast %28 : vector<16x1xf32> to vector<16x32xf32>
      %37 = arith.subf %24, %36 : vector<16x32xf32>
      %cst_26 = arith.constant 9.99999974E-6 : f32
      %38 = vector.broadcast %cst_26 : f32 to vector<16x1xf32>
      %39 = arith.addf %35, %38 : vector<16x1xf32>
      %40 = math.rsqrt %39 : vector<16x1xf32>
      %41 = vector.broadcast %40 : vector<16x1xf32> to vector<16x32xf32>
      %42 = arith.mulf %37, %41 : vector<16x32xf32>
      %c0_27 = arith.constant 0 : index
      %c0_28 = arith.constant 0 : index
      %43 = vector.load %arg7[%c0_27, %c0_28] : memref<1x32xf32, #tpu.memory_space<vmem>>, vector<1x32xf32>
      %44 = vector.broadcast %43 : vector<1x32xf32> to vector<16x32xf32>
      %45 = arith.mulf %42, %44 : vector<16x32xf32>
      %c0_29 = arith.constant 0 : index
      %c0_30 = arith.constant 0 : index
      %46 = vector.load %arg8[%c0_29, %c0_30] : memref<1x32xf32, #tpu.memory_space<vmem>>, vector<1x32xf32>
      %47 = vector.broadcast %46 : vector<1x32xf32> to vector<16x32xf32>
      %48 = arith.addf %45, %47 : vector<16x32xf32>
      %c0_31 = arith.constant 0 : index
      %c0_32 = arith.constant 0 : index
      %49 = vector.load %arg9[%c0_31, %c0_32] : memref<16x32xf32, #tpu.memory_space<vmem>>, vector<16x32xf32>
      tpu.vector_store %arg9[%c0_31, %c0_32], %48 {strides = array<i32>} : memref<16x32xf32, #tpu.memory_space<vmem>>, vector<16x32xf32>,
    } else {
    }
    return
  }
  func.func @transform_0(%arg0: i32, %arg1: i32) -> (i32, i32) {
    %c0_i32 = arith.constant 0 : i32
    %c0_i32_0 = arith.constant 0 : i32
    return %arg0, %c0_i32 : i32, i32
  }
  func.func @transform_1(%arg0: i32, %arg1: i32) -> (i32, i32) {
    %c0_i32 = arith.constant 0 : i32
    %c0_i32_0 = arith.constant 0 : i32
    return %c0_i32, %arg1 : i32, i32
  }
  func.func @transform_2(%arg0: i32, %arg1: i32) -> (i32, i32) {
    %c0_i32 = arith.constant 0 : i32
    %c0_i32_0 = arith.constant 0 : i32
    return %c0_i32, %arg1 : i32, i32
  }
  func.func @transform_3(%arg0: i32, %arg1: i32) -> (i32, i32) {
    %c0_i32 = arith.constant 0 : i32
    %c0_i32_0 = arith.constant 0 : i32
    return %arg1, %c0_i32 : i32, i32
  }
  func.func @transform_4(%arg0: i32, %arg1: i32) -> (i32, i32) {
    %c0_i32 = arith.constant 0 : i32
    %c0_i32_0 = arith.constant 0 : i32
    %c0_i32_1 = arith.constant 0 : i32
    return %c0_i32, %c0_i32_0 : i32, i32
  }
  func.func @transform_5(%arg0: i32, %arg1: i32) -> (i32, i32) {
    %c0_i32 = arith.constant 0 : i32
    %c0_i32_0 = arith.constant 0 : i32
    %c0_i32_1 = arith.constant 0 : i32
    return %c0_i32, %c0_i32_0 : i32, i32
  }
  func.func @transform_6(%arg0: i32, %arg1: i32) -> (i32, i32) {
    %c0_i32 = arith.constant 0 : i32
    %c0_i32_0 = arith.constant 0 : i32
    %c0_i32_1 = arith.constant 0 : i32
    return %c0_i32, %c0_i32_0 : i32, i32
  }
  func.func @transform_7(%arg0: i32, %arg1: i32) -> (i32, i32) {
    %c0_i32 = arith.constant 0 : i32
    %c0_i32_0 = arith.constant 0 : i32
    return %arg0, %c0_i32 : i32, i32
  }
}

module attributes {stable_mosaic.version = 11 : i64} {
  func.func @_matmul_kernel(%arg0: i32, %arg1: i32, %arg2: i32, %arg3: memref<16x32xf32, #tpu.memory_space<vmem>>, %arg4: memref<32x96xf32, #tpu.memory_space<vmem>>, %arg5: memref<1x96xf32, #tpu.memory_space<vmem>>, %arg6: memref<16x96xf32, #tpu.memory_space<vmem>>, %arg7: memref<16x96xf32, #tpu.memory_space<vmem>>) attributes {dimension_semantics = [#tpu.dimension_semantics<parallel>, #tpu.dimension_semantics<parallel>, #tpu.dimension_semantics<arbitrary>], iteration_bounds = array<i64: 1, 1, 1>, scalar_prefetch = 0 : i64, scratch_operands = 1 : i64, tpu.core_type = #tpu.core_type<tc>, window_params = [{transform_indices = @transform_0, window_bounds = array<i64: 16, 32>}, {transform_indices = @transform_1, window_bounds = array<i64: 32, 96>}, {transform_indices = @transform_2, window_bounds = array<i64: 1, 96>}, {transform_indices = @transform_3, window_bounds = array<i64: 16, 96>}]} {
    %c0_i32 = arith.constant 0 : i32
    %0 = arith.cmpi eq, %arg2, %c0_i32 : i32
    %1 = arith.extui %0 : i1 to i32
    %c0_i32_0 = arith.constant 0 : i32
    %2 = arith.cmpi ne, %1, %c0_i32_0 : i32
    scf.if %2 {
      %cst_10 = arith.constant 0.000000e+00 : f32
      %12 = vector.broadcast %cst_10 : f32 to vector<16x96xf32>
      %c0_11 = arith.constant 0 : index
      %c0_12 = arith.constant 0 : index
      %13 = vector.load %arg7[%c0_11, %c0_12] : memref<16x96xf32, #tpu.memory_space<vmem>>, vector<16x96xf32>
      tpu.vector_store %arg7[%c0_11, %c0_12], %12 {strides = array<i32>} : memref<16x96xf32, #tpu.memory_space<vmem>>, vector<16x96xf32>,
    } else {
    }
    %c0 = arith.constant 0 : index
    %c0_1 = arith.constant 0 : index
    %3 = vector.load %arg7[%c0, %c0_1] : memref<16x96xf32, #tpu.memory_space<vmem>>, vector<16x96xf32>
    %c0_2 = arith.constant 0 : index
    %c0_3 = arith.constant 0 : index
    %4 = vector.load %arg3[%c0_2, %c0_3] : memref<16x32xf32, #tpu.memory_space<vmem>>, vector<16x32xf32>
    %c0_4 = arith.constant 0 : index
    %c0_5 = arith.constant 0 : index
    %5 = vector.load %arg4[%c0_4, %c0_5] : memref<32x96xf32, #tpu.memory_space<vmem>>, vector<32x96xf32>
    %cst = arith.constant dense<0.000000e+00> : vector<16x96xf32>
    %6 = tpu.matmul %4, %5, %cst {dimension_numbers = #tpu.dot_dimension_numbers<[1], [0], [0], [1], [0, 0, 1, 1], [], []>} : vector<16x32xf32>, vector<32x96xf32>, vector<16x96xf32> -> vector<16x96xf32>
    %7 = arith.addf %3, %6 : vector<16x96xf32>
    %c0_6 = arith.constant 0 : index
    %c0_7 = arith.constant 0 : index
    %8 = vector.load %arg7[%c0_6, %c0_7] : memref<16x96xf32, #tpu.memory_space<vmem>>, vector<16x96xf32>
    tpu.vector_store %arg7[%c0_6, %c0_7], %7 {strides = array<i32>} : memref<16x96xf32, #tpu.memory_space<vmem>>, vector<16x96xf32>,
    %c0_i32_8 = arith.constant 0 : i32
    %9 = arith.cmpi eq, %arg2, %c0_i32_8 : i32
    %10 = arith.extui %9 : i1 to i32
    %c0_i32_9 = arith.constant 0 : i32
    %11 = arith.cmpi ne, %10, %c0_i32_9 : i32
    scf.if %11 {
      %c0_10 = arith.constant 0 : index
      %c0_11 = arith.constant 0 : index
      %12 = vector.load %arg7[%c0_10, %c0_11] : memref<16x96xf32, #tpu.memory_space<vmem>>, vector<16x96xf32>
      %c0_12 = arith.constant 0 : index
      %c0_13 = arith.constant 0 : index
      %13 = vector.load %arg5[%c0_12, %c0_13] : memref<1x96xf32, #tpu.memory_space<vmem>>, vector<1x96xf32>
      %14 = vector.broadcast %13 : vector<1x96xf32> to vector<16x96xf32>
      %15 = arith.addf %12, %14 : vector<16x96xf32>
      %c0_14 = arith.constant 0 : index
      %c0_15 = arith.constant 0 : index
      %16 = vector.load %arg6[%c0_14, %c0_15] : memref<16x96xf32, #tpu.memory_space<vmem>>, vector<16x96xf32>
      tpu.vector_store %arg6[%c0_14, %c0_15], %15 {strides = array<i32>} : memref<16x96xf32, #tpu.memory_space<vmem>>, vector<16x96xf32>,
    } else {
    }
    return
  }
  func.func @transform_0(%arg0: i32, %arg1: i32, %arg2: i32) -> (i32, i32) {
    %c0_i32 = arith.constant 0 : i32
    return %arg0, %arg2 : i32, i32
  }
  func.func @transform_1(%arg0: i32, %arg1: i32, %arg2: i32) -> (i32, i32) {
    %c0_i32 = arith.constant 0 : i32
    return %arg2, %arg1 : i32, i32
  }
  func.func @transform_2(%arg0: i32, %arg1: i32, %arg2: i32) -> (i32, i32) {
    %c0_i32 = arith.constant 0 : i32
    %c0_i32_0 = arith.constant 0 : i32
    return %c0_i32, %arg1 : i32, i32
  }
  func.func @transform_3(%arg0: i32, %arg1: i32, %arg2: i32) -> (i32, i32) {
    %c0_i32 = arith.constant 0 : i32
    return %arg0, %arg1 : i32, i32
  }
}

module attributes {stable_mosaic.version = 11 : i64} {
  func.func @_ln_kernel(%arg0: i32, %arg1: memref<16x32xf32, #tpu.memory_space<vmem>>, %arg2: memref<1x32xf32, #tpu.memory_space<vmem>>, %arg3: memref<1x32xf32, #tpu.memory_space<vmem>>, %arg4: memref<16x32xf32, #tpu.memory_space<vmem>>) attributes {dimension_semantics = [#tpu.dimension_semantics<parallel>], iteration_bounds = array<i64: 1>, scalar_prefetch = 0 : i64, scratch_operands = 0 : i64, tpu.core_type = #tpu.core_type<tc>, window_params = [{transform_indices = @transform_0, window_bounds = array<i64: 16, 32>}, {pipeline_mode = #tpu.pipeline_mode<synchronous>, transform_indices = @transform_1, window_bounds = array<i64: 1, 32>}, {pipeline_mode = #tpu.pipeline_mode<synchronous>, transform_indices = @transform_2, window_bounds = array<i64: 1, 32>}, {transform_indices = @transform_3, window_bounds = array<i64: 16, 32>}]} {
    %c0 = arith.constant 0 : index
    %c0_0 = arith.constant 0 : index
    %0 = vector.load %arg1[%c0, %c0_0] : memref<16x32xf32, #tpu.memory_space<vmem>>, vector<16x32xf32>
    %cst = arith.constant dense<0.000000e+00> : vector<16xf32>
    %1 = vector.multi_reduction <add>, %0, %cst [1] : vector<16x32xf32> to vector<16xf32>
    %2 = vector.shape_cast %1 : vector<16xf32> to vector<16x1xf32>
    %cst_1 = arith.constant 3.200000e+01 : f32
    %3 = vector.broadcast %cst_1 : f32 to vector<16x1xf32>
    %4 = arith.divf %2, %3 : vector<16x1xf32>
    %5 = vector.broadcast %4 : vector<16x1xf32> to vector<16x32xf32>
    %6 = arith.subf %0, %5 : vector<16x32xf32>
    %7 = arith.mulf %6, %6 : vector<16x32xf32>
    %cst_2 = arith.constant dense<0.000000e+00> : vector<16xf32>
    %8 = vector.multi_reduction <add>, %7, %cst_2 [1] : vector<16x32xf32> to vector<16xf32>
    %9 = vector.shape_cast %8 : vector<16xf32> to vector<16x1xf32>
    %cst_3 = arith.constant 3.200000e+01 : f32
    %10 = vector.broadcast %cst_3 : f32 to vector<16x1xf32>
    %11 = arith.divf %9, %10 : vector<16x1xf32>
    %12 = vector.broadcast %4 : vector<16x1xf32> to vector<16x32xf32>
    %13 = arith.subf %0, %12 : vector<16x32xf32>
    %cst_4 = arith.constant 9.99999974E-6 : f32
    %14 = vector.broadcast %cst_4 : f32 to vector<16x1xf32>
    %15 = arith.addf %11, %14 : vector<16x1xf32>
    %16 = math.rsqrt %15 : vector<16x1xf32>
    %17 = vector.broadcast %16 : vector<16x1xf32> to vector<16x32xf32>
    %18 = arith.mulf %13, %17 : vector<16x32xf32>
    %c0_5 = arith.constant 0 : index
    %c0_6 = arith.constant 0 : index
    %19 = vector.load %arg2[%c0_5, %c0_6] : memref<1x32xf32, #tpu.memory_space<vmem>>, vector<1x32xf32>
    %20 = vector.broadcast %19 : vector<1x32xf32> to vector<16x32xf32>
    %21 = arith.mulf %18, %20 : vector<16x32xf32>
    %c0_7 = arith.constant 0 : index
    %c0_8 = arith.constant 0 : index
    %22 = vector.load %arg3[%c0_7, %c0_8] : memref<1x32xf32, #tpu.memory_space<vmem>>, vector<1x32xf32>
    %23 = vector.broadcast %22 : vector<1x32xf32> to vector<16x32xf32>
    %24 = arith.addf %21, %23 : vector<16x32xf32>
    %c0_9 = arith.constant 0 : index
    %c0_10 = arith.constant 0 : index
    %25 = vector.load %arg4[%c0_9, %c0_10] : memref<16x32xf32, #tpu.memory_space<vmem>>, vector<16x32xf32>
    tpu.vector_store %arg4[%c0_9, %c0_10], %24 {strides = array<i32>} : memref<16x32xf32, #tpu.memory_space<vmem>>, vector<16x32xf32>,
    return
  }
  func.func @transform_0(%arg0: i32) -> (i32, i32) {
    %c0_i32 = arith.constant 0 : i32
    %c0_i32_0 = arith.constant 0 : i32
    return %arg0, %c0_i32 : i32, i32
  }
  func.func @transform_1(%arg0: i32) -> (i32, i32) {
    %c0_i32 = arith.constant 0 : i32
    %c0_i32_0 = arith.constant 0 : i32
    %c0_i32_1 = arith.constant 0 : i32
    return %c0_i32, %c0_i32_0 : i32, i32
  }
  func.func @transform_2(%arg0: i32) -> (i32, i32) {
    %c0_i32 = arith.constant 0 : i32
    %c0_i32_0 = arith.constant 0 : i32
    %c0_i32_1 = arith.constant 0 : i32
    return %c0_i32, %c0_i32_0 : i32, i32
  }
  func.func @transform_3(%arg0: i32) -> (i32, i32) {
    %c0_i32 = arith.constant 0 : i32
    %c0_i32_0 = arith.constant 0 : i32
    return %arg0, %c0_i32 : i32, i32
  }
}

</mosaic_0001>

<llo_original>
// kernel: my_transformer_decoder.17
$region0: #{my_transformer_decoder.17}
  #allocation0 [shape = 'u32[]', space=smem, size = 0x4, offset = 0x4, fixed_abs, tag = 'smem constant byte address 0x4 - core index']
  #allocation1 [shape = 'u32[72,128]{1,0:T(1,128)}', space=vmem, size = 0x9000, scoped, tag = 'internal scratch']
  #allocation2 [shape = 'f32[16,96]{1,0:T(8,128)}', space=vmem, size = 0x2000, scoped, tag = 'scratch operand']
  %s0 = inlined_call_operand.hbm [shape: f32[16,32], index: 0, kind: input, shape index: {}]
  %s1 = inlined_call_operand.vmem [shape: f32[32,96], index: 1, kind: input, shape index: {}]
  %s2 = inlined_call_operand.vmem [shape: f32[1,96], index: 2, kind: input, shape index: {}]
  %s3 = inlined_call_operand.vmem [shape: f32[16,96], index: 3, kind: output, shape index: {}]
  %s4 = sld [smem:[#allocation0]]
  $region34: #{my_transformer_decoder.17} parent=0
    _
  %s6 = ssub.s32 1, %s4
  %s7 = scalar_select 0, %s6, %s4
  $region1: #{my_transformer_decoder.17} parent=0
    #allocation3 [shape = 'u8[8192]{0}', space=vmem, size = 0x2000, scoped, tag = 'input window, operand 0, single buffered']
    #allocation4 [shape = 's32[1]{0}', space=sflag, size = 0x4, scoped, tag = 'scoped memory for my_transformer_decoder.17']
    %8 = vsyncpa [#allocation4], 0
    // Predicated region
    $region2: #{my_transformer_decoder.17} parent=1 // pred_check
      _
    $region3: #{my_transformer_decoder.17} parent=1 // pred_check_branch
      %10 = sbr.rel (0) target = $region5
    $region4: #{my_transformer_decoder.17} parent=1 // pred_region
      %12 = vsyncadd [#allocation4], 0
      %s13 = sshll.u32 %s0, 4
      %s14 = int_to_ptr.hbm [resolvable:$true] %s13
      %s15 = sshll.u32 [#allocation3], 4
      %s16 = int_to_ptr.vmem [resolvable:$true] %s15
      %21 = dma.hbm_to_vmem [thread:$0]  %s14, 256, %s16, [#allocation4], 128, 128, 8
    $region5: #{my_transformer_decoder.17} parent=1 // pred_fallthru
      _
    // Predicated region
    $region6: #{my_transformer_decoder.17} parent=1 // pred_check
      _
    $region7: #{my_transformer_decoder.17} parent=1 // pred_check_branch
      %23 = sbr.rel (0) target = $region9
    $region8: #{my_transformer_decoder.17} parent=1 // pred_region
      _
    $region9: #{my_transformer_decoder.17} parent=1 // pred_fallthru
      _
    // Predicated region
    $region10: #{my_transformer_decoder.17} parent=1 // pred_check
      _
    $region11: #{my_transformer_decoder.17} parent=1 // pred_check_branch
      %25 = sbr.rel (0) target = $region13
    $region12: #{my_transformer_decoder.17} parent=1 // pred_region
      _
    $region13: #{my_transformer_decoder.17} parent=1 // pred_fallthru
      _
    // Predicated region
    $region14: #{my_transformer_decoder.17} parent=1 // pred_check
      _
    $region15: #{my_transformer_decoder.17} parent=1 // pred_check_branch
      %27 = sbr.rel (0) target = $region17
    $region16: #{my_transformer_decoder.17} parent=1 // pred_region
      %29 = dma.done [#allocation4], 256
    $region17: #{my_transformer_decoder.17} parent=1 // pred_fallthru
      _
    %p30 = scmp.eq.s32.totalorder 0, 0
    // Predicated region
    $region18: #{my_transformer_decoder.17} parent=1 // pred_check
      %p31 = pneg %p30
    $region19: #{my_transformer_decoder.17} parent=1 // pred_check_branch
      %33 = sbr.rel (%p31) target = $region21
    $region20: #{my_transformer_decoder.17} parent=1 // pred_region
      %vm34 = vcmask 785408
      %35 = vst.msk [vmem:[#allocation2] sm:$0xff] %vm34, 0.0
      %36 = vst.msk [vmem:[#allocation2 + $0x8] sm:$0xff] %vm34, 0.0
    $region21: #{my_transformer_decoder.17} parent=1 // pred_fallthru
      _
    %v37 = vld [vmem:[#allocation2] sm:$0xff]
    %v38 = vld [vmem:[#allocation2 + $0x8] sm:$0xff]
    %v39 = vld [vmem:[#allocation3] sm:$0xff]
    %v40 = vld [vmem:[#allocation3 + $0x8] sm:$0xff]
    %v41 = vld [vmem:[%s1] sm:$0xff]
    %v42 = vld [vmem:[%s1 + $0x8] sm:$0xff]
    %v43 = vld [vmem:[%s1 + $0x10] sm:$0xff]
    %v44 = vld [vmem:[%s1 + $0x18] sm:$0xff]
    %vm45 = vcmask 261120
    %v47 = vsel %vm45, %v39, 0
    %v50 = vsel %vm45, %v40, 0
    %52 = vmatpush.msra.mxu0 0.0
    %53 = vmatpush.msra.mxu0 0.0
    %54 = vmatpush.msra.mxu0 0.0
    %55 = vmatpush.msra.mxu0 0.0
    %56 = vmatpush.msra.mxu0 0.0
    %57 = vmatpush.msra.mxu0 0.0
    %58 = vmatpush.msra.mxu0 0.0
    %59 = vmatpush.msra.mxu0 0.0
    %60 = vmatpush.msra.mxu0 0.0
    %61 = vmatpush.msra.mxu0 0.0
    %62 = vmatpush.msra.mxu0 0.0
    %63 = vmatpush.msra.mxu0 0.0
    %64 = vmatpush.msra.mxu0 %v44
    %65 = vmatpush.msra.mxu0 %v43
    %66 = vmatpush.msra.mxu0 %v42
    %67 = vmatpush.msra.mxu0 %v41
    %68 = vmatmul.f32.gmra.mxu0 %v47
    %v69 = vpop.f32.mrf.mxu0
    %v70 = vadd.f32 0.0, %v69
    %71 = vmatmul.f32.gmra.mxu0 %v50
    %v72 = vpop.f32.mrf.mxu0
    %v73 = vadd.f32 0.0, %v72
    %74 = vdwg.mxu0
    %v75 = vadd.f32 %v37, %v70
    %v76 = vadd.f32 %v38, %v73
    %vm77 = vcmask 785408
    %78 = vst.msk [vmem:[#allocation2] sm:$0xff] %vm77, %v75
    %79 = vst.msk [vmem:[#allocation2 + $0x8] sm:$0xff] %vm77, %v76
    // Predicated region
    $region22: #{my_transformer_decoder.17} parent=1 // pred_check
      %p80 = pneg %p30
    $region23: #{my_transformer_decoder.17} parent=1 // pred_check_branch
      %82 = sbr.rel (%p80) target = $region25
    $region24: #{my_transformer_decoder.17} parent=1 // pred_region
      %v83 = vld [vmem:[#allocation2] sm:$0xff]
      %v84 = vld [vmem:[#allocation2 + $0x8] sm:$0xff]
      %v85 = vld [vmem:[%s2] sm:$0x1]
      %v87 = vperm.slane %v85, 0
      %v89 = vadd.f32 %v83, %v87
      %v90 = vadd.f32 %v84, %v87
      %91 = vst.msk [vmem:[%s3] sm:$0xff] %vm77, %v89
      %92 = vst.msk [vmem:[%s3 + $0x8] sm:$0xff] %vm77, %v90
    $region25: #{my_transformer_decoder.17} parent=1 // pred_fallthru
      _
    // Predicated region
    $region26: #{my_transformer_decoder.17} parent=1 // pred_check
      _
    $region27: #{my_transformer_decoder.17} parent=1 // pred_check_branch
      %94 = sbr.rel (0) target = $region29
    $region28: #{my_transformer_decoder.17} parent=1 // pred_region
      _
    $region29: #{my_transformer_decoder.17} parent=1 // pred_fallthru
      _
    // Predicated region
    $region30: #{my_transformer_decoder.17} parent=1 // pred_check
      _
    $region31: #{my_transformer_decoder.17} parent=1 // pred_check_branch
      %96 = sbr.rel (0) target = $region33
    $region32: #{my_transformer_decoder.17} parent=1 // pred_region
      _
    $region33: #{my_transformer_decoder.17} parent=1 // pred_fallthru
      _
    %97 = vsyncpa [#allocation4], 1

// kernel: my_transformer_decoder.19
$region0: #{my_transformer_decoder.19}
  #allocation0 [shape = 'u32[]', space=smem, size = 0x4, offset = 0x4, fixed_abs, tag = 'smem constant byte address 0x4 - core index']
  #allocation1 [shape = 'u32[72,128]{1,0:T(1,128)}', space=vmem, size = 0x9000, scoped, tag = 'internal scratch']
  #allocation2 [shape = 'f32[16,32]{1,0:T(8,128)}', space=vmem, size = 0x2000, scoped, tag = 'scratch operand']
  %s0 = inlined_call_operand.vmem [shape: f32[16,32], index: 0, kind: input, shape index: {}]
  %s1 = inlined_call_operand.vmem [shape: f32[32,32], index: 1, kind: input, shape index: {}]
  %s2 = inlined_call_operand.vmem [shape: f32[1,32], index: 2, kind: input, shape index: {}]
  %s3 = inlined_call_operand.vmem [shape: f32[16,32], index: 3, kind: input, shape index: {}]
  %s4 = inlined_call_operand.vmem [shape: f32[1,32], index: 4, kind: input, shape index: {}]
  %s5 = inlined_call_operand.vmem [shape: f32[1,32], index: 5, kind: input, shape index: {}]
  %s6 = inlined_call_operand.vmem [shape: f32[16,32], index: 6, kind: output, shape index: {}]
  %s7 = sld [smem:[#allocation0]]
  $region42: #{my_transformer_decoder.19} parent=0
    _
  %s9 = ssub.s32 1, %s7
  %s10 = scalar_select 0, %s9, %s7
  // Predicated region
  $region2: #{my_transformer_decoder.19} parent=0 // pred_check
    _
  $region3: #{my_transformer_decoder.19} parent=0 // pred_check_branch
    %12 = sbr.rel (0) target = $region5
  $region4: #{my_transformer_decoder.19} parent=0 // pred_region
    _
  $region5: #{my_transformer_decoder.19} parent=0 // pred_fallthru
    _
  // Predicated region
  $region6: #{my_transformer_decoder.19} parent=0 // pred_check
    _
  $region7: #{my_transformer_decoder.19} parent=0 // pred_check_branch
    %14 = sbr.rel (0) target = $region9
  $region8: #{my_transformer_decoder.19} parent=0 // pred_region
    _
  $region9: #{my_transformer_decoder.19} parent=0 // pred_fallthru
    _
  // Predicated region
  $region10: #{my_transformer_decoder.19} parent=0 // pred_check
    _
  $region11: #{my_transformer_decoder.19} parent=0 // pred_check_branch
    %16 = sbr.rel (0) target = $region13
  $region12: #{my_transformer_decoder.19} parent=0 // pred_region
    _
  $region13: #{my_transformer_decoder.19} parent=0 // pred_fallthru
    _
  // Predicated region
  $region14: #{my_transformer_decoder.19} parent=0 // pred_check
    _
  $region15: #{my_transformer_decoder.19} parent=0 // pred_check_branch
    %18 = sbr.rel (0) target = $region17
  $region16: #{my_transformer_decoder.19} parent=0 // pred_region
    _
  $region17: #{my_transformer_decoder.19} parent=0 // pred_fallthru
    _
  // Predicated region
  $region18: #{my_transformer_decoder.19} parent=0 // pred_check
    _
  $region19: #{my_transformer_decoder.19} parent=0 // pred_check_branch
    %20 = sbr.rel (0) target = $region21
  $region20: #{my_transformer_decoder.19} parent=0 // pred_region
    _
  $region21: #{my_transformer_decoder.19} parent=0 // pred_fallthru
    _
  // Predicated region
  $region22: #{my_transformer_decoder.19} parent=0 // pred_check
    _
  $region23: #{my_transformer_decoder.19} parent=0 // pred_check_branch
    %22 = sbr.rel (0) target = $region25
  $region24: #{my_transformer_decoder.19} parent=0 // pred_region
    _
  $region25: #{my_transformer_decoder.19} parent=0 // pred_fallthru
    _
  %p23 = scmp.eq.s32.totalorder 0, 0
  // Predicated region
  $region26: #{my_transformer_decoder.19} parent=0 // pred_check
    %p24 = pneg %p23
  $region27: #{my_transformer_decoder.19} parent=0 // pred_check_branch
    %26 = sbr.rel (%p24) target = $region29
  $region28: #{my_transformer_decoder.19} parent=0 // pred_region
    %vm27 = vcmask 261120
    %28 = vst.msk [vmem:[#allocation2] sm:$0xff] %vm27, 0.0
    %29 = vst.msk [vmem:[#allocation2 + $0x8] sm:$0xff] %vm27, 0.0
  $region29: #{my_transformer_decoder.19} parent=0 // pred_fallthru
    _
  %v30 = vld [vmem:[#allocation2] sm:$0xff]
  %v31 = vld [vmem:[#allocation2 + $0x8] sm:$0xff]
  %v32 = vld [vmem:[%s0] sm:$0xff]
  %v33 = vld [vmem:[%s0 + $0x8] sm:$0xff]
  %v34 = vld [vmem:[%s1] sm:$0xff]
  %v35 = vld [vmem:[%s1 + $0x8] sm:$0xff]
  %v36 = vld [vmem:[%s1 + $0x10] sm:$0xff]
  %v37 = vld [vmem:[%s1 + $0x18] sm:$0xff]
  %vm38 = vcmask 261120
  %v40 = vsel %vm38, %v32, 0
  %v43 = vsel %vm38, %v33, 0
  %45 = vmatpush.msra.mxu0 0.0
  %46 = vmatpush.msra.mxu0 0.0
  %47 = vmatpush.msra.mxu0 0.0
  %48 = vmatpush.msra.mxu0 0.0
  %49 = vmatpush.msra.mxu0 0.0
  %50 = vmatpush.msra.mxu0 0.0
  %51 = vmatpush.msra.mxu0 0.0
  %52 = vmatpush.msra.mxu0 0.0
  %53 = vmatpush.msra.mxu0 0.0
  %54 = vmatpush.msra.mxu0 0.0
  %55 = vmatpush.msra.mxu0 0.0
  %56 = vmatpush.msra.mxu0 0.0
  %57 = vmatpush.msra.mxu0 %v37
  %58 = vmatpush.msra.mxu0 %v36
  %59 = vmatpush.msra.mxu0 %v35
  %60 = vmatpush.msra.mxu0 %v34
  %61 = vmatmul.f32.gmra.mxu0 %v40
  %v62 = vpop.f32.mrf.mxu0
  %v63 = vadd.f32 0.0, %v62
  %64 = vmatmul.f32.gmra.mxu0 %v43
  %v65 = vpop.f32.mrf.mxu0
  %v66 = vadd.f32 0.0, %v65
  %67 = vdwg.mxu0
  %v68 = vadd.f32 %v30, %v63
  %v69 = vadd.f32 %v31, %v66
  %70 = vst.msk [vmem:[#allocation2] sm:$0xff] %vm38, %v68
  %71 = vst.msk [vmem:[#allocation2 + $0x8] sm:$0xff] %vm38, %v69
  // Predicated region
  $region30: #{my_transformer_decoder.19} parent=0 // pred_check
    %p72 = pneg %p23
  $region31: #{my_transformer_decoder.19} parent=0 // pred_check_branch
    %74 = sbr.rel (%p72) target = $region33
  $region32: #{my_transformer_decoder.19} parent=0 // pred_region
    %v75 = vld [vmem:[#allocation2] sm:$0xff]
    %v76 = vld [vmem:[#allocation2 + $0x8] sm:$0xff]
    %v77 = vld [vmem:[%s2] sm:$0x1]
    %v79 = vperm.slane %v77, 0
    %v81 = vadd.f32 %v75, %v79
    %v82 = vadd.f32 %v76, %v79
    %v83 = vld [vmem:[%s3] sm:$0xff]
    %v84 = vld [vmem:[%s3 + $0x8] sm:$0xff]
    %v85 = vadd.f32 %v81, %v83
    %v86 = vadd.f32 %v82, %v84
    %v87 = vsel %vm38, %v85, 0.0
    %88 = vadd.xlane.f32.xlu0 %v87
    %v89 = vpop.xlane.xlu0 %88
    %v90 = vsel %vm38, %v86, 0.0
    %91 = vadd.xlane.f32.xlu0 %v90
    %v92 = vpop.xlane.xlu0 %91
    %v93 = vrcp.pop 32.0
    %v94 = vmul.f32 32.0, %v93
    %v95 = vsub.f32 1.0, %v94
    %v96 = vmul.f32 %v93, %v95
    %v97 = vadd.f32 %v93, %v96
    %vm98 = vweird.f32 %v93
    %v99 = vsel %vm98, %v93, %v97
    %v100 = vmul.f32 %v89, %v99
    %v101 = vmul.f32 %v92, %v99
    %v102 = vsub.f32 %v85, %v100
    %v103 = vsub.f32 %v86, %v101
    %v104 = vmul.f32 %v102, %v102
    %v105 = vmul.f32 %v103, %v103
    %v106 = vsel %vm38, %v104, 0.0
    %107 = vadd.xlane.f32.xlu0 %v106
    %v108 = vpop.xlane.xlu0 %107
    %v109 = vsel %vm38, %v105, 0.0
    %110 = vadd.xlane.f32.xlu0 %v109
    %v111 = vpop.xlane.xlu0 %110
    %v112 = vmul.f32 %v108, %v99
    %v113 = vmul.f32 %v111, %v99
    %v114 = vadd.f32 %v112, 1e-05
    %v115 = vadd.f32 %v113, 1e-05
    %v116 = vrsqrt.pop %v114
    %v117 = vmul.f32 %v116, %v114
    %v118 = vmul.f32 %v117, %v116
    %v119 = vmul.f32 0.5, %v118
    %v120 = vsub.f32 1.5, %v119
    %v121 = vmul.f32 %v116, %v120
    %vm122 = vweird.f32 %v114
    %vm123 = vweird.f32 %v116
    %vm124 = vmor %vm122, %vm123
    %v125 = vsel %vm124, %v116, %v121
    %v126 = vrsqrt.pop %v115
    %v127 = vmul.f32 %v126, %v115
    %v128 = vmul.f32 %v127, %v126
    %v129 = vmul.f32 0.5, %v128
    %v130 = vsub.f32 1.5, %v129
    %v131 = vmul.f32 %v126, %v130
    %vm132 = vweird.f32 %v115
    %vm133 = vweird.f32 %v126
    %vm134 = vmor %vm132, %vm133
    %v135 = vsel %vm134, %v126, %v131
    %v136 = vmul.f32 %v102, %v125
    %v137 = vmul.f32 %v103, %v135
    %v138 = vld [vmem:[%s4] sm:$0x1]
    %v140 = vperm.slane %v138, 0
    %v142 = vmul.f32 %v136, %v140
    %v143 = vmul.f32 %v137, %v140
    %v144 = vld [vmem:[%s5] sm:$0x1]
    %v146 = vperm.slane %v144, 0
    %v148 = vadd.f32 %v142, %v146
    %v149 = vadd.f32 %v143, %v146
    %150 = vst.msk [vmem:[%s6] sm:$0xff] %vm38, %v148
    %151 = vst.msk [vmem:[%s6 + $0x8] sm:$0xff] %vm38, %v149
  $region33: #{my_transformer_decoder.19} parent=0 // pred_fallthru
    _
  // Predicated region
  $region34: #{my_transformer_decoder.19} parent=0 // pred_check
    _
  $region35: #{my_transformer_decoder.19} parent=0 // pred_check_branch
    %153 = sbr.rel (0) target = $region37
  $region36: #{my_transformer_decoder.19} parent=0 // pred_region
    _
  $region37: #{my_transformer_decoder.19} parent=0 // pred_fallthru
    _
  // Predicated region
  $region38: #{my_transformer_decoder.19} parent=0 // pred_check
    _
  $region39: #{my_transformer_decoder.19} parent=0 // pred_check_branch
    %155 = sbr.rel (0) target = $region41
  $region40: #{my_transformer_decoder.19} parent=0 // pred_region
    _
  $region41: #{my_transformer_decoder.19} parent=0 // pred_fallthru
    _

// kernel: my_transformer_decoder.18
$region0: #{my_transformer_decoder.18}
  #allocation0 [shape = 'u32[]', space=smem, size = 0x4, offset = 0x4, fixed_abs, tag = 'smem constant byte address 0x4 - core index']
  #allocation1 [shape = 'u32[72,128]{1,0:T(1,128)}', space=vmem, size = 0x9000, scoped, tag = 'internal scratch']
  %s0 = inlined_call_operand.vmem [shape: f32[2,4,8,8], index: 0, kind: input, shape index: {}]
  %s1 = inlined_call_operand.vmem [shape: f32[2,4,8,8], index: 1, kind: input, shape index: {}]
  %s2 = inlined_call_operand.vmem [shape: f32[2,4,8,8], index: 2, kind: input, shape index: {}]
  %s3 = inlined_call_operand.vmem [shape: f32[8,8], index: 3, kind: input, shape index: {}]
  %s4 = inlined_call_operand.vmem [shape: f32[2,1,8], index: 4, kind: input, shape index: {}]
  %s5 = inlined_call_operand.vmem [shape: f32[2,8,32], index: 5, kind: output, shape index: {}]
  %s6 = sld [smem:[#allocation0]]
  $region53: #{my_transformer_decoder.18} parent=0
    _
  %s8 = ssub.s32 1, %s6
  %s9 = scalar_select 0, %s8, %s6
  loop: start=0, step=1, limit=4
  $region2: #{my_transformer_decoder.18} parent=0 // loop_pre_header
    _
  $region3: #{my_transformer_decoder.18} parent=0 // loop_header
    %s11 = sphi 0, %s15
    %p12 = scmp.ge.s32.totalorder %s11, 4
    %s21 = sphi 0, %s23
    %s24 = sphi 0, %s21
    %s25 = sphi 0, %s24
    %s41 = sphi 0, %s25
    %s47 = sphi 0, %s49
    %s50 = sphi 0, %s47
    %s51 = sphi 0, %s50
    %s67 = sphi 0, %s51
    %s73 = sphi 0, %s75
    %s76 = sphi 0, %s73
    %s77 = sphi 0, %s76
    %s93 = sphi 0, %s77
    %s97 = sphi 0, %s97
    %s99 = sphi 0, %s97
    %s100 = sphi 0, %s99
    %s114 = sphi 0, %s100
    %s120 = sphi 0, %s122
    %s123 = sphi 0, %s120
    %s124 = sphi 0, %s123
    %s140 = sphi 0, %s124
    %s146 = sphi 0, %s148
    %s149 = sphi 0, %s146
    %s150 = sphi 0, %s149
    %s166 = sphi 0, %s150
  $region4: #{my_transformer_decoder.18} parent=0 // loop_header_branch
    %14 = sbr.rel (%p12) target = $region8
  $region5: #{my_transformer_decoder.18} parent=0 // loop_body
    %s16 = ssub.s32 %s11, 1
    %s17 = ssub.s32 %s11, 2
    %s18 = sadd.s32 %s11, 1
    %s19 = ssub.s32 %s11, %s18
    %p20 = scmp.eq.s32.totalorder %s19, 0
    %s22 = sadd.s32 %s21, 1
    %s23 = scalar_select %p20, %s21, %s22
    %p26 = pneg %p20
    %p27 = scmp.eq.s32.totalorder %s11, 1
    %p28 = por %p26, %p27
    %p29 = scmp.ne.s32.totalorder %s21, %s24
    %p30 = scmp.eq.s32.totalorder %s11, 0
    %p31 = por %p29, %p30
    %p32 = scmp.ne.s32.totalorder %s21, %s24
    %p33 = scmp.eq.s32.totalorder %s16, 1
    %p34 = por %p32, %p33
    %p35 = scmp.ne.s32.totalorder %s24, %s25
    %p36 = scmp.eq.s32.totalorder %s16, 0
    %p37 = por %p35, %p36
    %p38 = scmp.ne.s32.totalorder %s24, %s25
    %p39 = scmp.eq.s32.totalorder %s17, 1
    %p40 = por %p38, %p39
    %p42 = scmp.ne.s32.totalorder %s25, %s41
    %p43 = scmp.eq.s32.totalorder %s17, 0
    %p44 = por %p42, %p43
    %s45 = ssub.s32 %s11, %s18
    %p46 = scmp.eq.s32.totalorder %s45, 0
    %s48 = sadd.s32 %s47, 1
    %s49 = scalar_select %p46, %s47, %s48
    %p52 = pneg %p46
    %p53 = scmp.eq.s32.totalorder %s11, 1
    %p54 = por %p52, %p53
    %p55 = scmp.ne.s32.totalorder %s47, %s50
    %p56 = scmp.eq.s32.totalorder %s11, 0
    %p57 = por %p55, %p56
    %p58 = scmp.ne.s32.totalorder %s47, %s50
    %p59 = scmp.eq.s32.totalorder %s16, 1
    %p60 = por %p58, %p59
    %p61 = scmp.ne.s32.totalorder %s50, %s51
    %p62 = scmp.eq.s32.totalorder %s16, 0
    %p63 = por %p61, %p62
    %p64 = scmp.ne.s32.totalorder %s50, %s51
    %p65 = scmp.eq.s32.totalorder %s17, 1
    %p66 = por %p64, %p65
    %p68 = scmp.ne.s32.totalorder %s51, %s67
    %p69 = scmp.eq.s32.totalorder %s17, 0
    %p70 = por %p68, %p69
    %s71 = ssub.s32 %s11, %s18
    %p72 = scmp.eq.s32.totalorder %s71, 0
    %s74 = sadd.s32 %s73, 1
    %s75 = scalar_select %p72, %s73, %s74
    %p78 = pneg %p72
    %p79 = scmp.eq.s32.totalorder %s11, 1
    %p80 = por %p78, %p79
    %p81 = scmp.ne.s32.totalorder %s73, %s76
    %p82 = scmp.eq.s32.totalorder %s11, 0
    %p83 = por %p81, %p82
    %p84 = scmp.ne.s32.totalorder %s73, %s76
    %p85 = scmp.eq.s32.totalorder %s16, 1
    %p86 = por %p84, %p85
    %p87 = scmp.ne.s32.totalorder %s76, %s77
    %p88 = scmp.eq.s32.totalorder %s16, 0
    %p89 = por %p87, %p88
    %p90 = scmp.ne.s32.totalorder %s76, %s77
    %p91 = scmp.eq.s32.totalorder %s17, 1
    %p92 = por %p90, %p91
    %p94 = scmp.ne.s32.totalorder %s77, %s93
    %p95 = scmp.eq.s32.totalorder %s17, 0
    %p96 = por %p94, %p95
    %s98 = sadd.s32 %s97, 1
    %p101 = scmp.eq.s32.totalorder %s11, 1
    %p102 = scmp.ne.s32.totalorder %s97, %s99
    %p103 = scmp.eq.s32.totalorder %s11, 0
    %p104 = por %p102, %p103
    %p105 = scmp.ne.s32.totalorder %s97, %s99
    %p106 = scmp.eq.s32.totalorder %s16, 1
    %p107 = por %p105, %p106
    %p108 = scmp.ne.s32.totalorder %s99, %s100
    %p109 = scmp.eq.s32.totalorder %s16, 0
    %p110 = por %p108, %p109
    %p111 = scmp.ne.s32.totalorder %s99, %s100
    %p112 = scmp.eq.s32.totalorder %s17, 1
    %p113 = por %p111, %p112
    %p115 = scmp.ne.s32.totalorder %s100, %s114
    %p116 = scmp.eq.s32.totalorder %s17, 0
    %p117 = por %p115, %p116
    %s118 = ssub.s32 %s11, %s18
    %p119 = scmp.eq.s32.totalorder %s118, 0
    %s121 = sadd.s32 %s120, 1
    %s122 = scalar_select %p119, %s120, %s121
    %p125 = pneg %p119
    %p126 = scmp.eq.s32.totalorder %s11, 1
    %p127 = por %p125, %p126
    %p128 = scmp.ne.s32.totalorder %s120, %s123
    %p129 = scmp.eq.s32.totalorder %s11, 0
    %p130 = por %p128, %p129
    %p131 = scmp.ne.s32.totalorder %s120, %s123
    %p132 = scmp.eq.s32.totalorder %s16, 1
    %p133 = por %p131, %p132
    %p134 = scmp.ne.s32.totalorder %s123, %s124
    %p135 = scmp.eq.s32.totalorder %s16, 0
    %p136 = por %p134, %p135
    %p137 = scmp.ne.s32.totalorder %s123, %s124
    %p138 = scmp.eq.s32.totalorder %s17, 1
    %p139 = por %p137, %p138
    %p141 = scmp.ne.s32.totalorder %s124, %s140
    %p142 = scmp.eq.s32.totalorder %s17, 0
    %p143 = por %p141, %p142
    %s144 = ssub.s32 %s11, %s18
    %p145 = scmp.eq.s32.totalorder %s144, 0
    %s147 = sadd.s32 %s146, 1
    %s148 = scalar_select %p145, %s146, %s147
    %p151 = pneg %p145
    %p152 = scmp.eq.s32.totalorder %s11, 1
    %p153 = por %p151, %p152
    %p154 = scmp.ne.s32.totalorder %s146, %s149
    %p155 = scmp.eq.s32.totalorder %s11, 0
    %p156 = por %p154, %p155
    %p157 = scmp.ne.s32.totalorder %s146, %s149
    %p158 = scmp.eq.s32.totalorder %s16, 1
    %p159 = por %p157, %p158
    %p160 = scmp.ne.s32.totalorder %s149, %s150
    %p161 = scmp.eq.s32.totalorder %s16, 0
    %p162 = por %p160, %p161
    %p163 = scmp.ne.s32.totalorder %s149, %s150
    %p164 = scmp.eq.s32.totalorder %s17, 1
    %p165 = por %p163, %p164
    %p167 = scmp.ne.s32.totalorder %s150, %s166
    %p168 = scmp.eq.s32.totalorder %s17, 0
    %p169 = por %p167, %p168
    %p170 = scmp.le.s32.totalorder 1, %s11
    %p171 = scmp.lt.s32.totalorder %s11, 3
    %p172 = pnand %p170, %p171
    %p173 = pneg %p172
    // Predicated region
    $region9: #{my_transformer_decoder.18} parent=5 // pred_check
      _
    $region10: #{my_transformer_decoder.18} parent=5 // pred_check_branch
      %175 = sbr.rel (%p172) target = $region12
    $region11: #{my_transformer_decoder.18} parent=5 // pred_region
      %s176 = ssub.s32 %s11, 1
      // Predicated region
      $region13: #{my_transformer_decoder.18} parent=11 // pred_check
        %p177 = pneg %p110
      $region14: #{my_transformer_decoder.18} parent=11 // pred_check_branch
        %179 = sbr.rel (%p177) target = $region16
      $region15: #{my_transformer_decoder.18} parent=11 // pred_region
        _
      $region16: #{my_transformer_decoder.18} parent=11 // pred_fallthru
        _
    $region12: #{my_transformer_decoder.18} parent=5 // pred_fallthru
      _
    %p180 = scmp.lt.s32.totalorder %s11, 2
    // Predicated region
    $region17: #{my_transformer_decoder.18} parent=5 // pred_check
      %p181 = pneg %p180
    $region18: #{my_transformer_decoder.18} parent=5 // pred_check_branch
      %183 = sbr.rel (%p181) target = $region20
    $region19: #{my_transformer_decoder.18} parent=5 // pred_region
      // Predicated region
      $region21: #{my_transformer_decoder.18} parent=19 // pred_check
        %p184 = pneg %p31
      $region22: #{my_transformer_decoder.18} parent=19 // pred_check_branch
        %186 = sbr.rel (%p184) target = $region24
      $region23: #{my_transformer_decoder.18} parent=19 // pred_region
        %p187 = scmp.lt.s32.totalorder %s11, 1
        %s188 = scalar_select %p187, %s11, 1
        %s189 = smul.addr %s188, 4
        %s190 = smul.addr %s189, 8
        %s191 = scalar_lea.vmem %s0, %s190
      $region24: #{my_transformer_decoder.18} parent=19 // pred_fallthru
        _
      // Predicated region
      $region25: #{my_transformer_decoder.18} parent=19 // pred_check
        %p192 = pneg %p57
      $region26: #{my_transformer_decoder.18} parent=19 // pred_check_branch
        %194 = sbr.rel (%p192) target = $region28
      $region27: #{my_transformer_decoder.18} parent=19 // pred_region
        %p195 = scmp.lt.s32.totalorder %s11, 1
        %s196 = scalar_select %p195, %s11, 1
        %s197 = smul.addr %s196, 4
        %s198 = smul.addr %s197, 8
        %s199 = scalar_lea.vmem %s1, %s198
      $region28: #{my_transformer_decoder.18} parent=19 // pred_fallthru
        _
      // Predicated region
      $region29: #{my_transformer_decoder.18} parent=19 // pred_check
        %p200 = pneg %p83
      $region30: #{my_transformer_decoder.18} parent=19 // pred_check_branch
        %202 = sbr.rel (%p200) target = $region32
      $region31: #{my_transformer_decoder.18} parent=19 // pred_region
        %p203 = scmp.lt.s32.totalorder %s11, 1
        %s204 = scalar_select %p203, %s11, 1
        %s205 = smul.addr %s204, 4
        %s206 = smul.addr %s205, 8
        %s207 = scalar_lea.vmem %s2, %s206
      $region32: #{my_transformer_decoder.18} parent=19 // pred_fallthru
        _
      // Predicated region
      $region33: #{my_transformer_decoder.18} parent=19 // pred_check
        %p208 = pneg %p130
      $region34: #{my_transformer_decoder.18} parent=19 // pred_check_branch
        %210 = sbr.rel (%p208) target = $region36
      $region35: #{my_transformer_decoder.18} parent=19 // pred_region
        %p211 = scmp.lt.s32.totalorder %s11, 1
        %s212 = scalar_select %p211, %s11, 1
        %s213 = scalar_lea.vmem %s4, %s212
      $region36: #{my_transformer_decoder.18} parent=19 // pred_fallthru
        _
    $region20: #{my_transformer_decoder.18} parent=5 // pred_fallthru
      _
    %p214 = scmp.le.s32.totalorder 1, %s11
    %p215 = scmp.lt.s32.totalorder %s11, 3
    %p216 = pnand %p214, %p215
    %p217 = pneg %p216
    // Predicated region
    $region37: #{my_transformer_decoder.18} parent=5 // pred_check
      _
    $region38: #{my_transformer_decoder.18} parent=5 // pred_check_branch
      %219 = sbr.rel (%p216) target = $region40
    $region39: #{my_transformer_decoder.18} parent=5 // pred_region
      %s220 = ssub.s32 %s11, 1
      %p221 = scmp.lt.s32.totalorder %s16, 1
      %s222 = scalar_select %p221, %s16, 1
      %s223 = smul.addr %s222, 4
      %s224 = smul.addr %s223, 8
      %s225 = scalar_lea.vmem %s0, %s224
      %p226 = pneg %p37
      %p227 = pneg %p34
      %p228 = scmp.lt.s32.totalorder %s16, 1
      %s229 = scalar_select %p228, %s16, 1
      %s230 = smul.addr %s229, 4
      %s231 = smul.addr %s230, 8
      %s232 = scalar_lea.vmem %s1, %s231
      %p233 = pneg %p63
      %p234 = pneg %p60
      %p235 = scmp.lt.s32.totalorder %s16, 1
      %s236 = scalar_select %p235, %s16, 1
      %s237 = smul.addr %s236, 4
      %s238 = smul.addr %s237, 8
      %s239 = scalar_lea.vmem %s2, %s238
      %p240 = pneg %p89
      %p241 = pneg %p86
      %p242 = pneg %p110
      %p243 = pneg %p107
      %p244 = scmp.lt.s32.totalorder %s16, 1
      %s245 = scalar_select %p244, %s16, 1
      %s246 = scalar_lea.vmem %s4, %s245
      %p247 = pneg %p136
      %p248 = pneg %p133
      %p249 = pneg %p162
      %p250 = pneg %p159
      %p251 = scmp.lt.s32.totalorder %s16, 1
      %s252 = scalar_select %p251, %s16, 1
      %s253 = smul.addr %s252, 8
      %s254 = scalar_lea.vmem %s5, %s253
      %p255 = scmp.lt.s32.totalorder %s16, 1
      %s256 = scalar_select %p255, %s16, 1
      %s257 = smul.addr %s256, 4
      %s258 = smul.addr %s257, 8
      %s259 = scalar_lea.vmem %s0, %s258
      %p260 = scmp.lt.s32.totalorder %s16, 1
      %s261 = scalar_select %p260, %s16, 1
      %s262 = smul.addr %s261, 4
      %s263 = smul.addr %s262, 8
      %s264 = scalar_lea.vmem %s1, %s263
      %p265 = scmp.lt.s32.totalorder %s16, 1
      %s266 = scalar_select %p265, %s16, 1
      %s267 = smul.addr %s266, 4
      %s268 = smul.addr %s267, 8
      %s269 = scalar_lea.vmem %s2, %s268
      %p270 = scmp.lt.s32.totalorder %s16, 1
      %s271 = scalar_select %p270, %s16, 1
      %s272 = scalar_lea.vmem %s4, %s271
      %p273 = scmp.lt.s32.totalorder %s16, 1
      %s274 = scalar_select %p273, %s16, 1
      %s275 = smul.addr %s274, 8
      %s276 = scalar_lea.vmem %s5, %s275
      %v277 = vld [vmem:[%s259] sm:$0xff]
      %v278 = vld [vmem:[%s259 + $0x8] sm:$0xff]
      %v279 = vld [vmem:[%s259 + $0x10] sm:$0xff]
      %v280 = vld [vmem:[%s259 + $0x18] sm:$0xff]
      %v281 = vld [vmem:[%s264] sm:$0xff]
      %v282 = vld [vmem:[%s264 + $0x8] sm:$0xff]
      %v283 = vld [vmem:[%s264 + $0x10] sm:$0xff]
      %v284 = vld [vmem:[%s264 + $0x18] sm:$0xff]
      %v285 = vld [vmem:[%s269] sm:$0xff]
      %v286 = vld [vmem:[%s269 + $0x8] sm:$0xff]
      %v287 = vld [vmem:[%s269 + $0x10] sm:$0xff]
      %v288 = vld [vmem:[%s269 + $0x18] sm:$0xff]
      %v289 = vld [vmem:[%s3] sm:$0xff]
      %vm290 = vcmask 64512
      %v292 = vsel %vm290, %v277, 0
      %v295 = vsel %vm290, %v281, 0
      %297 = vmatpush.xpose.msra.mxu0 0.0
      %298 = vmatpush.xpose.msra.mxu0 0.0
      %299 = vmatpush.xpose.msra.mxu0 0.0
      %300 = vmatpush.xpose.msra.mxu0 0.0
      %301 = vmatpush.xpose.msra.mxu0 0.0
      %302 = vmatpush.xpose.msra.mxu0 0.0
      %303 = vmatpush.xpose.msra.mxu0 0.0
      %304 = vmatpush.xpose.msra.mxu0 0.0
      %305 = vmatpush.xpose.msra.mxu0 0.0
      %306 = vmatpush.xpose.msra.mxu0 0.0
      %307 = vmatpush.xpose.msra.mxu0 0.0
      %308 = vmatpush.xpose.msra.mxu0 0.0
      %309 = vmatpush.xpose.msra.mxu0 0.0
      %310 = vmatpush.xpose.msra.mxu0 0.0
      %311 = vmatpush.xpose.msra.mxu0 0.0
      %312 = vmatpush.xpose.msra.mxu0 %v295
      %313 = vmatmul.f32.gmra.mxu0 %v292
      %v314 = vpop.f32.mrf.mxu0
      %v315 = vadd.f32 %v289, %v314
      %316 = vdwg.mxu0
      %v318 = vsel %vm290, %v278, 0
      %v321 = vsel %vm290, %v282, 0
      %323 = vmatpush.xpose.msra.mxu0 0.0
      %324 = vmatpush.xpose.msra.mxu0 0.0
      %325 = vmatpush.xpose.msra.mxu0 0.0
      %326 = vmatpush.xpose.msra.mxu0 0.0
      %327 = vmatpush.xpose.msra.mxu0 0.0
      %328 = vmatpush.xpose.msra.mxu0 0.0
      %329 = vmatpush.xpose.msra.mxu0 0.0
      %330 = vmatpush.xpose.msra.mxu0 0.0
      %331 = vmatpush.xpose.msra.mxu0 0.0
      %332 = vmatpush.xpose.msra.mxu0 0.0
      %333 = vmatpush.xpose.msra.mxu0 0.0
      %334 = vmatpush.xpose.msra.mxu0 0.0
      %335 = vmatpush.xpose.msra.mxu0 0.0
      %336 = vmatpush.xpose.msra.mxu0 0.0
      %337 = vmatpush.xpose.msra.mxu0 0.0
      %338 = vmatpush.xpose.msra.mxu0 %v321
      %339 = vmatmul.f32.gmra.mxu0 %v318
      %v340 = vpop.f32.mrf.mxu0
      %v341 = vadd.f32 %v289, %v340
      %342 = vdwg.mxu0
      %v344 = vsel %vm290, %v279, 0
      %v347 = vsel %vm290, %v283, 0
      %349 = vmatpush.xpose.msra.mxu0 0.0
      %350 = vmatpush.xpose.msra.mxu0 0.0
      %351 = vmatpush.xpose.msra.mxu0 0.0
      %352 = vmatpush.xpose.msra.mxu0 0.0
      %353 = vmatpush.xpose.msra.mxu0 0.0
      %354 = vmatpush.xpose.msra.mxu0 0.0
      %355 = vmatpush.xpose.msra.mxu0 0.0
      %356 = vmatpush.xpose.msra.mxu0 0.0
      %357 = vmatpush.xpose.msra.mxu0 0.0
      %358 = vmatpush.xpose.msra.mxu0 0.0
      %359 = vmatpush.xpose.msra.mxu0 0.0
      %360 = vmatpush.xpose.msra.mxu0 0.0
      %361 = vmatpush.xpose.msra.mxu0 0.0
      %362 = vmatpush.xpose.msra.mxu0 0.0
      %363 = vmatpush.xpose.msra.mxu0 0.0
      %364 = vmatpush.xpose.msra.mxu0 %v347
      %365 = vmatmul.f32.gmra.mxu0 %v344
      %v366 = vpop.f32.mrf.mxu0
      %v367 = vadd.f32 %v289, %v366
      %368 = vdwg.mxu0
      %v370 = vsel %vm290, %v280, 0
      %v373 = vsel %vm290, %v284, 0
      %375 = vmatpush.xpose.msra.mxu0 0.0
      %376 = vmatpush.xpose.msra.mxu0 0.0
      %377 = vmatpush.xpose.msra.mxu0 0.0
      %378 = vmatpush.xpose.msra.mxu0 0.0
      %379 = vmatpush.xpose.msra.mxu0 0.0
      %380 = vmatpush.xpose.msra.mxu0 0.0
      %381 = vmatpush.xpose.msra.mxu0 0.0
      %382 = vmatpush.xpose.msra.mxu0 0.0
      %383 = vmatpush.xpose.msra.mxu0 0.0
      %384 = vmatpush.xpose.msra.mxu0 0.0
      %385 = vmatpush.xpose.msra.mxu0 0.0
      %386 = vmatpush.xpose.msra.mxu0 0.0
      %387 = vmatpush.xpose.msra.mxu0 0.0
      %388 = vmatpush.xpose.msra.mxu0 0.0
      %389 = vmatpush.xpose.msra.mxu0 0.0
      %390 = vmatpush.xpose.msra.mxu0 %v373
      %391 = vmatmul.f32.gmra.mxu0 %v370
      %v392 = vpop.f32.mrf.mxu0
      %v393 = vadd.f32 %v289, %v392
      %394 = vdwg.mxu0
      %v395 = vld [vmem:[%s272] sm:$0x1]
      %v397 = vperm.slane %v395, 0
      %v399 = vadd.f32 %v315, %v397
      %v400 = vadd.f32 %v341, %v397
      %v401 = vadd.f32 %v367, %v397
      %v402 = vadd.f32 %v393, %v397
      %v403 = vsel %vm290, %v399, -inf
      %404 = vmax.xlane.f32.xlu0 %v403
      %v405 = vpop.xlane.xlu0 %404
      %v406 = vsel %vm290, %v400, -inf
      %407 = vmax.xlane.f32.xlu0 %v406
      %v408 = vpop.xlane.xlu0 %407
      %v409 = vsel %vm290, %v401, -inf
      %410 = vmax.xlane.f32.xlu0 %v409
      %v411 = vpop.xlane.xlu0 %410
      %v412 = vsel %vm290, %v402, -inf
      %413 = vmax.xlane.f32.xlu0 %v412
      %v414 = vpop.xlane.xlu0 %413
      %v415 = vsub.f32 %v399, %v405
      %v416 = vsub.f32 %v400, %v408
      %v417 = vsub.f32 %v401, %v411
      %v418 = vsub.f32 %v402, %v414
      %v419 = vmul.f32 %v415, 1.442695
      %v420 = vpow.pop %v419
      %v421 = vmul.f32 %v416, 1.442695
      %v422 = vpow.pop %v421
      %v423 = vmul.f32 %v417, 1.442695
      %v424 = vpow.pop %v423
      %v425 = vmul.f32 %v418, 1.442695
      %v426 = vpow.pop %v425
      %v427 = vsel %vm290, %v420, 0.0
      %428 = vadd.xlane.f32.xlu0 %v427
      %v429 = vpop.xlane.xlu0 %428
      %v430 = vsel %vm290, %v422, 0.0
      %431 = vadd.xlane.f32.xlu0 %v430
      %v432 = vpop.xlane.xlu0 %431
      %v433 = vsel %vm290, %v424, 0.0
      %434 = vadd.xlane.f32.xlu0 %v433
      %v435 = vpop.xlane.xlu0 %434
      %v436 = vsel %vm290, %v426, 0.0
      %437 = vadd.xlane.f32.xlu0 %v436
      %v438 = vpop.xlane.xlu0 %437
      %v439 = vrcp.pop %v429
      %v440 = vrcp.pop %v432
      %v441 = vrcp.pop %v435
      %v442 = vrcp.pop %v438
      %v443 = vmul.f32 %v420, %v439
      %v444 = vmul.f32 %v422, %v440
      %v445 = vmul.f32 %v424, %v441
      %v446 = vmul.f32 %v426, %v442
      %v448 = vsel %vm290, %v443, 0
      %450 = vmatpush.msra.mxu0 0.0
      %451 = vmatpush.msra.mxu0 0.0
      %452 = vmatpush.msra.mxu0 0.0
      %453 = vmatpush.msra.mxu0 0.0
      %454 = vmatpush.msra.mxu0 0.0
      %455 = vmatpush.msra.mxu0 0.0
      %456 = vmatpush.msra.mxu0 0.0
      %457 = vmatpush.msra.mxu0 0.0
      %458 = vmatpush.msra.mxu0 0.0
      %459 = vmatpush.msra.mxu0 0.0
      %460 = vmatpush.msra.mxu0 0.0
      %461 = vmatpush.msra.mxu0 0.0
      %462 = vmatpush.msra.mxu0 0.0
      %463 = vmatpush.msra.mxu0 0.0
      %464 = vmatpush.msra.mxu0 0.0
      %465 = vmatpush.msra.mxu0 %v285
      %466 = vmatmul.f32.gmra.mxu0 %v448
      %v467 = vpop.f32.mrf.mxu0
      %v468 = vadd.f32 0.0, %v467
      %469 = vdwg.mxu0
      %v471 = vsel %vm290, %v444, 0
      %473 = vmatpush.msra.mxu0 0.0
      %474 = vmatpush.msra.mxu0 0.0
      %475 = vmatpush.msra.mxu0 0.0
      %476 = vmatpush.msra.mxu0 0.0
      %477 = vmatpush.msra.mxu0 0.0
      %478 = vmatpush.msra.mxu0 0.0
      %479 = vmatpush.msra.mxu0 0.0
      %480 = vmatpush.msra.mxu0 0.0
      %481 = vmatpush.msra.mxu0 0.0
      %482 = vmatpush.msra.mxu0 0.0
      %483 = vmatpush.msra.mxu0 0.0
      %484 = vmatpush.msra.mxu0 0.0
      %485 = vmatpush.msra.mxu0 0.0
      %486 = vmatpush.msra.mxu0 0.0
      %487 = vmatpush.msra.mxu0 0.0
      %488 = vmatpush.msra.mxu0 %v286
      %489 = vmatmul.f32.gmra.mxu0 %v471
      %v490 = vpop.f32.mrf.mxu0
      %v491 = vadd.f32 0.0, %v490
      %492 = vdwg.mxu0
      %v494 = vsel %vm290, %v445, 0
      %496 = vmatpush.msra.mxu0 0.0
      %497 = vmatpush.msra.mxu0 0.0
      %498 = vmatpush.msra.mxu0 0.0
      %499 = vmatpush.msra.mxu0 0.0
      %500 = vmatpush.msra.mxu0 0.0
      %501 = vmatpush.msra.mxu0 0.0
      %502 = vmatpush.msra.mxu0 0.0
      %503 = vmatpush.msra.mxu0 0.0
      %504 = vmatpush.msra.mxu0 0.0
      %505 = vmatpush.msra.mxu0 0.0
      %506 = vmatpush.msra.mxu0 0.0
      %507 = vmatpush.msra.mxu0 0.0
      %508 = vmatpush.msra.mxu0 0.0
      %509 = vmatpush.msra.mxu0 0.0
      %510 = vmatpush.msra.mxu0 0.0
      %511 = vmatpush.msra.mxu0 %v287
      %512 = vmatmul.f32.gmra.mxu0 %v494
      %v513 = vpop.f32.mrf.mxu0
      %v514 = vadd.f32 0.0, %v513
      %515 = vdwg.mxu0
      %v517 = vsel %vm290, %v446, 0
      %519 = vmatpush.msra.mxu0 0.0
      %520 = vmatpush.msra.mxu0 0.0
      %521 = vmatpush.msra.mxu0 0.0
      %522 = vmatpush.msra.mxu0 0.0
      %523 = vmatpush.msra.mxu0 0.0
      %524 = vmatpush.msra.mxu0 0.0
      %525 = vmatpush.msra.mxu0 0.0
      %526 = vmatpush.msra.mxu0 0.0
      %527 = vmatpush.msra.mxu0 0.0
      %528 = vmatpush.msra.mxu0 0.0
      %529 = vmatpush.msra.mxu0 0.0
      %530 = vmatpush.msra.mxu0 0.0
      %531 = vmatpush.msra.mxu0 0.0
      %532 = vmatpush.msra.mxu0 0.0
      %533 = vmatpush.msra.mxu0 0.0
      %534 = vmatpush.msra.mxu0 %v288
      %535 = vmatmul.f32.gmra.mxu0 %v517
      %v536 = vpop.f32.mrf.mxu0
      %v537 = vadd.f32 0.0, %v536
      %538 = vdwg.mxu0
      %539 = vst.msk [vmem:[%s276] sm:$0xff] %vm290, %v468
      %541 = vrot.lane.b32.xlu0 %v491, 8
      %v542 = vpop.permute.xlu0 %541
      %vm544 = vcmask 130112
      %545 = vst.msk [vmem:[%s276] sm:$0xff] %vm544, %v542
      %547 = vrot.lane.b32.xlu0 %v514, 16
      %v548 = vpop.permute.xlu0 %547
      %vm550 = vcmask 195712
      %551 = vst.msk [vmem:[%s276] sm:$0xff] %vm550, %v548
      %553 = vrot.lane.b32.xlu0 %v537, 24
      %v554 = vpop.permute.xlu0 %553
      %vm556 = vcmask 261312
      %557 = vst.msk [vmem:[%s276] sm:$0xff] %vm556, %v554
      %p558 = scmp.lt.s32.totalorder %s16, 1
      %s559 = scalar_select %p558, %s16, 1
      %s560 = smul.addr %s559, 8
      %s561 = scalar_lea.vmem %s5, %s560
      // Predicated region
      $region41: #{my_transformer_decoder.18} parent=39 // pred_check
        %p562 = pneg %p159
      $region42: #{my_transformer_decoder.18} parent=39 // pred_check_branch
        %564 = sbr.rel (%p562) target = $region44
      $region43: #{my_transformer_decoder.18} parent=39 // pred_region
        _
      $region44: #{my_transformer_decoder.18} parent=39 // pred_fallthru
        _
    $region40: #{my_transformer_decoder.18} parent=5 // pred_fallthru
      _
    %p565 = scmp.le.s32.totalorder 2, %s11
    // Predicated region
    $region45: #{my_transformer_decoder.18} parent=5 // pred_check
      %p566 = pneg %p565
    $region46: #{my_transformer_decoder.18} parent=5 // pred_check_branch
      %568 = sbr.rel (%p566) target = $region48
    $region47: #{my_transformer_decoder.18} parent=5 // pred_region
      %s569 = ssub.s32 %s11, 2
      // Predicated region
      $region49: #{my_transformer_decoder.18} parent=47 // pred_check
        %p570 = pneg %p165
      $region50: #{my_transformer_decoder.18} parent=47 // pred_check_branch
        %572 = sbr.rel (%p570) target = $region52
      $region51: #{my_transformer_decoder.18} parent=47 // pred_region
        %p573 = scmp.lt.s32.totalorder %s17, 1
        %s574 = scalar_select %p573, %s17, 1
        %s575 = smul.addr %s574, 8
        %s576 = scalar_lea.vmem %s5, %s575
      $region52: #{my_transformer_decoder.18} parent=47 // pred_fallthru
        _
    $region48: #{my_transformer_decoder.18} parent=5 // pred_fallthru
      _
  $region6: #{my_transformer_decoder.18} parent=0 // loop_footer
    %s15 = sadd.s32 1, %s11
  $region7: #{my_transformer_decoder.18} parent=0 // loop_footer_branch
    %10 = sbr.rel target = $region3
  $region8: #{my_transformer_decoder.18} parent=0 // loop_exit
    _

// kernel: my_transformer_decoder.20
$region0: #{my_transformer_decoder.20}
  #allocation0 [shape = 'u32[]', space=smem, size = 0x4, offset = 0x4, fixed_abs, tag = 'smem constant byte address 0x4 - core index']
  #allocation1 [shape = 'u32[72,128]{1,0:T(1,128)}', space=vmem, size = 0x9000, scoped, tag = 'internal scratch']
  #allocation2 [shape = 'f32[16,32]{1,0:T(8,128)}', space=vmem, size = 0x2000, scoped, tag = 'scratch operand']
  %s0 = inlined_call_operand.vmem [shape: f32[16,32], index: 0, kind: input, shape index: {}]
  %s1 = inlined_call_operand.vmem [shape: f32[32,32], index: 1, kind: input, shape index: {}]
  %s2 = inlined_call_operand.vmem [shape: f32[1,32], index: 2, kind: input, shape index: {}]
  %s3 = inlined_call_operand.vmem [shape: f32[16,32], index: 3, kind: output, shape index: {}]
  %s4 = sld [smem:[#allocation0]]
  $region30: #{my_transformer_decoder.20} parent=0
    _
  %s6 = ssub.s32 1, %s4
  %s7 = scalar_select 0, %s6, %s4
  // Predicated region
  $region2: #{my_transformer_decoder.20} parent=0 // pred_check
    _
  $region3: #{my_transformer_decoder.20} parent=0 // pred_check_branch
    %9 = sbr.rel (0) target = $region5
  $region4: #{my_transformer_decoder.20} parent=0 // pred_region
    _
  $region5: #{my_transformer_decoder.20} parent=0 // pred_fallthru
    _
  // Predicated region
  $region6: #{my_transformer_decoder.20} parent=0 // pred_check
    _
  $region7: #{my_transformer_decoder.20} parent=0 // pred_check_branch
    %11 = sbr.rel (0) target = $region9
  $region8: #{my_transformer_decoder.20} parent=0 // pred_region
    _
  $region9: #{my_transformer_decoder.20} parent=0 // pred_fallthru
    _
  // Predicated region
  $region10: #{my_transformer_decoder.20} parent=0 // pred_check
    _
  $region11: #{my_transformer_decoder.20} parent=0 // pred_check_branch
    %13 = sbr.rel (0) target = $region13
  $region12: #{my_transformer_decoder.20} parent=0 // pred_region
    _
  $region13: #{my_transformer_decoder.20} parent=0 // pred_fallthru
    _
  %p14 = scmp.eq.s32.totalorder 0, 0
  // Predicated region
  $region14: #{my_transformer_decoder.20} parent=0 // pred_check
    %p15 = pneg %p14
  $region15: #{my_transformer_decoder.20} parent=0 // pred_check_branch
    %17 = sbr.rel (%p15) target = $region17
  $region16: #{my_transformer_decoder.20} parent=0 // pred_region
    %vm18 = vcmask 261120
    %19 = vst.msk [vmem:[#allocation2] sm:$0xff] %vm18, 0.0
    %20 = vst.msk [vmem:[#allocation2 + $0x8] sm:$0xff] %vm18, 0.0
  $region17: #{my_transformer_decoder.20} parent=0 // pred_fallthru
    _
  %v21 = vld [vmem:[#allocation2] sm:$0xff]
  %v22 = vld [vmem:[#allocation2 + $0x8] sm:$0xff]
  %v23 = vld [vmem:[%s0] sm:$0xff]
  %v24 = vld [vmem:[%s0 + $0x8] sm:$0xff]
  %v25 = vld [vmem:[%s1] sm:$0xff]
  %v26 = vld [vmem:[%s1 + $0x8] sm:$0xff]
  %v27 = vld [vmem:[%s1 + $0x10] sm:$0xff]
  %v28 = vld [vmem:[%s1 + $0x18] sm:$0xff]
  %vm29 = vcmask 261120
  %v31 = vsel %vm29, %v23, 0
  %v34 = vsel %vm29, %v24, 0
  %36 = vmatpush.msra.mxu0 0.0
  %37 = vmatpush.msra.mxu0 0.0
  %38 = vmatpush.msra.mxu0 0.0
  %39 = vmatpush.msra.mxu0 0.0
  %40 = vmatpush.msra.mxu0 0.0
  %41 = vmatpush.msra.mxu0 0.0
  %42 = vmatpush.msra.mxu0 0.0
  %43 = vmatpush.msra.mxu0 0.0
  %44 = vmatpush.msra.mxu0 0.0
  %45 = vmatpush.msra.mxu0 0.0
  %46 = vmatpush.msra.mxu0 0.0
  %47 = vmatpush.msra.mxu0 0.0
  %48 = vmatpush.msra.mxu0 %v28
  %49 = vmatpush.msra.mxu0 %v27
  %50 = vmatpush.msra.mxu0 %v26
  %51 = vmatpush.msra.mxu0 %v25
  %52 = vmatmul.f32.gmra.mxu0 %v31
  %v53 = vpop.f32.mrf.mxu0
  %v54 = vadd.f32 0.0, %v53
  %55 = vmatmul.f32.gmra.mxu0 %v34
  %v56 = vpop.f32.mrf.mxu0
  %v57 = vadd.f32 0.0, %v56
  %58 = vdwg.mxu0
  %v59 = vadd.f32 %v21, %v54
  %v60 = vadd.f32 %v22, %v57
  %61 = vst.msk [vmem:[#allocation2] sm:$0xff] %vm29, %v59
  %62 = vst.msk [vmem:[#allocation2 + $0x8] sm:$0xff] %vm29, %v60
  // Predicated region
  $region18: #{my_transformer_decoder.20} parent=0 // pred_check
    %p63 = pneg %p14
  $region19: #{my_transformer_decoder.20} parent=0 // pred_check_branch
    %65 = sbr.rel (%p63) target = $region21
  $region20: #{my_transformer_decoder.20} parent=0 // pred_region
    %v66 = vld [vmem:[#allocation2] sm:$0xff]
    %v67 = vld [vmem:[#allocation2 + $0x8] sm:$0xff]
    %v68 = vld [vmem:[%s2] sm:$0x1]
    %v70 = vperm.slane %v68, 0
    %v72 = vadd.f32 %v66, %v70
    %v73 = vadd.f32 %v67, %v70
    %74 = vst.msk [vmem:[%s3] sm:$0xff] %vm29, %v72
    %75 = vst.msk [vmem:[%s3 + $0x8] sm:$0xff] %vm29, %v73
  $region21: #{my_transformer_decoder.20} parent=0 // pred_fallthru
    _
  // Predicated region
  $region22: #{my_transformer_decoder.20} parent=0 // pred_check
    _
  $region23: #{my_transformer_decoder.20} parent=0 // pred_check_branch
    %77 = sbr.rel (0) target = $region25
  $region24: #{my_transformer_decoder.20} parent=0 // pred_region
    _
  $region25: #{my_transformer_decoder.20} parent=0 // pred_fallthru
    _
  // Predicated region
  $region26: #{my_transformer_decoder.20} parent=0 // pred_check
    _
  $region27: #{my_transformer_decoder.20} parent=0 // pred_check_branch
    %79 = sbr.rel (0) target = $region29
  $region28: #{my_transformer_decoder.20} parent=0 // pred_region
    _
  $region29: #{my_transformer_decoder.20} parent=0 // pred_fallthru
    _

// kernel: my_transformer_decoder.21
$region0: #{my_transformer_decoder.21}
  #allocation0 [shape = 'u32[]', space=smem, size = 0x4, offset = 0x4, fixed_abs, tag = 'smem constant byte address 0x4 - core index']
  #allocation1 [shape = 'u32[72,128]{1,0:T(1,128)}', space=vmem, size = 0x9000, scoped, tag = 'internal scratch']
  #allocation2 [shape = 'f32[16,64]{1,0:T(8,128)}', space=vmem, size = 0x2000, scoped, tag = 'scratch operand']
  %s0 = inlined_call_operand.vmem [shape: f32[16,32], index: 0, kind: input, shape index: {}]
  %s1 = inlined_call_operand.vmem [shape: f32[32,64], index: 1, kind: input, shape index: {}]
  %s2 = inlined_call_operand.vmem [shape: f32[1,64], index: 2, kind: input, shape index: {}]
  %s3 = inlined_call_operand.vmem [shape: f32[16,64], index: 3, kind: output, shape index: {}]
  %s4 = sld [smem:[#allocation0]]
  $region30: #{my_transformer_decoder.21} parent=0
    _
  %s6 = ssub.s32 1, %s4
  %s7 = scalar_select 0, %s6, %s4
  // Predicated region
  $region2: #{my_transformer_decoder.21} parent=0 // pred_check
    _
  $region3: #{my_transformer_decoder.21} parent=0 // pred_check_branch
    %9 = sbr.rel (0) target = $region5
  $region4: #{my_transformer_decoder.21} parent=0 // pred_region
    _
  $region5: #{my_transformer_decoder.21} parent=0 // pred_fallthru
    _
  // Predicated region
  $region6: #{my_transformer_decoder.21} parent=0 // pred_check
    _
  $region7: #{my_transformer_decoder.21} parent=0 // pred_check_branch
    %11 = sbr.rel (0) target = $region9
  $region8: #{my_transformer_decoder.21} parent=0 // pred_region
    _
  $region9: #{my_transformer_decoder.21} parent=0 // pred_fallthru
    _
  // Predicated region
  $region10: #{my_transformer_decoder.21} parent=0 // pred_check
    _
  $region11: #{my_transformer_decoder.21} parent=0 // pred_check_branch
    %13 = sbr.rel (0) target = $region13
  $region12: #{my_transformer_decoder.21} parent=0 // pred_region
    _
  $region13: #{my_transformer_decoder.21} parent=0 // pred_fallthru
    _
  %p14 = scmp.eq.s32.totalorder 0, 0
  // Predicated region
  $region14: #{my_transformer_decoder.21} parent=0 // pred_check
    %p15 = pneg %p14
  $region15: #{my_transformer_decoder.21} parent=0 // pred_check_branch
    %17 = sbr.rel (%p15) target = $region17
  $region16: #{my_transformer_decoder.21} parent=0 // pred_region
    %vm18 = vcmask 523264
    %19 = vst.msk [vmem:[#allocation2] sm:$0xff] %vm18, 0.0
    %20 = vst.msk [vmem:[#allocation2 + $0x8] sm:$0xff] %vm18, 0.0
  $region17: #{my_transformer_decoder.21} parent=0 // pred_fallthru
    _
  %v21 = vld [vmem:[#allocation2] sm:$0xff]
  %v22 = vld [vmem:[#allocation2 + $0x8] sm:$0xff]
  %v23 = vld [vmem:[%s0] sm:$0xff]
  %v24 = vld [vmem:[%s0 + $0x8] sm:$0xff]
  %v25 = vld [vmem:[%s1] sm:$0xff]
  %v26 = vld [vmem:[%s1 + $0x8] sm:$0xff]
  %v27 = vld [vmem:[%s1 + $0x10] sm:$0xff]
  %v28 = vld [vmem:[%s1 + $0x18] sm:$0xff]
  %vm29 = vcmask 261120
  %v31 = vsel %vm29, %v23, 0
  %v34 = vsel %vm29, %v24, 0
  %36 = vmatpush.msra.mxu0 0.0
  %37 = vmatpush.msra.mxu0 0.0
  %38 = vmatpush.msra.mxu0 0.0
  %39 = vmatpush.msra.mxu0 0.0
  %40 = vmatpush.msra.mxu0 0.0
  %41 = vmatpush.msra.mxu0 0.0
  %42 = vmatpush.msra.mxu0 0.0
  %43 = vmatpush.msra.mxu0 0.0
  %44 = vmatpush.msra.mxu0 0.0
  %45 = vmatpush.msra.mxu0 0.0
  %46 = vmatpush.msra.mxu0 0.0
  %47 = vmatpush.msra.mxu0 0.0
  %48 = vmatpush.msra.mxu0 %v28
  %49 = vmatpush.msra.mxu0 %v27
  %50 = vmatpush.msra.mxu0 %v26
  %51 = vmatpush.msra.mxu0 %v25
  %52 = vmatmul.f32.gmra.mxu0 %v31
  %v53 = vpop.f32.mrf.mxu0
  %v54 = vadd.f32 0.0, %v53
  %55 = vmatmul.f32.gmra.mxu0 %v34
  %v56 = vpop.f32.mrf.mxu0
  %v57 = vadd.f32 0.0, %v56
  %58 = vdwg.mxu0
  %v59 = vadd.f32 %v21, %v54
  %v60 = vadd.f32 %v22, %v57
  %vm61 = vcmask 523264
  %62 = vst.msk [vmem:[#allocation2] sm:$0xff] %vm61, %v59
  %63 = vst.msk [vmem:[#allocation2 + $0x8] sm:$0xff] %vm61, %v60
  // Predicated region
  $region18: #{my_transformer_decoder.21} parent=0 // pred_check
    %p64 = pneg %p14
  $region19: #{my_transformer_decoder.21} parent=0 // pred_check_branch
    %66 = sbr.rel (%p64) target = $region21
  $region20: #{my_transformer_decoder.21} parent=0 // pred_region
    %v67 = vld [vmem:[#allocation2] sm:$0xff]
    %v68 = vld [vmem:[#allocation2 + $0x8] sm:$0xff]
    %v69 = vld [vmem:[%s2] sm:$0x1]
    %v71 = vperm.slane %v69, 0
    %v73 = vadd.f32 %v67, %v71
    %v74 = vadd.f32 %v68, %v71
    %75 = vst.msk [vmem:[%s3] sm:$0xff] %vm61, %v73
    %76 = vst.msk [vmem:[%s3 + $0x8] sm:$0xff] %vm61, %v74
  $region21: #{my_transformer_decoder.21} parent=0 // pred_fallthru
    _
  // Predicated region
  $region22: #{my_transformer_decoder.21} parent=0 // pred_check
    _
  $region23: #{my_transformer_decoder.21} parent=0 // pred_check_branch
    %78 = sbr.rel (0) target = $region25
  $region24: #{my_transformer_decoder.21} parent=0 // pred_region
    _
  $region25: #{my_transformer_decoder.21} parent=0 // pred_fallthru
    _
  // Predicated region
  $region26: #{my_transformer_decoder.21} parent=0 // pred_check
    _
  $region27: #{my_transformer_decoder.21} parent=0 // pred_check_branch
    %80 = sbr.rel (0) target = $region29
  $region28: #{my_transformer_decoder.21} parent=0 // pred_region
    _
  $region29: #{my_transformer_decoder.21} parent=0 // pred_fallthru
    _

// kernel: my_transformer_decoder.25
$region0: #{my_transformer_decoder.25}
  #allocation0 [shape = 'u32[]', space=smem, size = 0x4, offset = 0x4, fixed_abs, tag = 'smem constant byte address 0x4 - core index']
  #allocation1 [shape = 'u32[72,128]{1,0:T(1,128)}', space=vmem, size = 0x9000, scoped, tag = 'internal scratch']
  #allocation2 [shape = 'f32[16,96]{1,0:T(8,128)}', space=vmem, size = 0x2000, scoped, tag = 'scratch operand']
  %s0 = inlined_call_operand.vmem [shape: f32[16,32], index: 0, kind: input, shape index: {}]
  %s1 = inlined_call_operand.vmem [shape: f32[32,96], index: 1, kind: input, shape index: {}]
  %s2 = inlined_call_operand.vmem [shape: f32[1,96], index: 2, kind: input, shape index: {}]
  %s3 = inlined_call_operand.vmem [shape: f32[16,96], index: 3, kind: output, shape index: {}]
  %s4 = sld [smem:[#allocation0]]
  $region30: #{my_transformer_decoder.25} parent=0
    _
  %s6 = ssub.s32 1, %s4
  %s7 = scalar_select 0, %s6, %s4
  // Predicated region
  $region2: #{my_transformer_decoder.25} parent=0 // pred_check
    _
  $region3: #{my_transformer_decoder.25} parent=0 // pred_check_branch
    %9 = sbr.rel (0) target = $region5
  $region4: #{my_transformer_decoder.25} parent=0 // pred_region
    _
  $region5: #{my_transformer_decoder.25} parent=0 // pred_fallthru
    _
  // Predicated region
  $region6: #{my_transformer_decoder.25} parent=0 // pred_check
    _
  $region7: #{my_transformer_decoder.25} parent=0 // pred_check_branch
    %11 = sbr.rel (0) target = $region9
  $region8: #{my_transformer_decoder.25} parent=0 // pred_region
    _
  $region9: #{my_transformer_decoder.25} parent=0 // pred_fallthru
    _
  // Predicated region
  $region10: #{my_transformer_decoder.25} parent=0 // pred_check
    _
  $region11: #{my_transformer_decoder.25} parent=0 // pred_check_branch
    %13 = sbr.rel (0) target = $region13
  $region12: #{my_transformer_decoder.25} parent=0 // pred_region
    _
  $region13: #{my_transformer_decoder.25} parent=0 // pred_fallthru
    _
  %p14 = scmp.eq.s32.totalorder 0, 0
  // Predicated region
  $region14: #{my_transformer_decoder.25} parent=0 // pred_check
    %p15 = pneg %p14
  $region15: #{my_transformer_decoder.25} parent=0 // pred_check_branch
    %17 = sbr.rel (%p15) target = $region17
  $region16: #{my_transformer_decoder.25} parent=0 // pred_region
    %vm18 = vcmask 785408
    %19 = vst.msk [vmem:[#allocation2] sm:$0xff] %vm18, 0.0
    %20 = vst.msk [vmem:[#allocation2 + $0x8] sm:$0xff] %vm18, 0.0
  $region17: #{my_transformer_decoder.25} parent=0 // pred_fallthru
    _
  %v21 = vld [vmem:[#allocation2] sm:$0xff]
  %v22 = vld [vmem:[#allocation2 + $0x8] sm:$0xff]
  %v23 = vld [vmem:[%s0] sm:$0xff]
  %v24 = vld [vmem:[%s0 + $0x8] sm:$0xff]
  %v25 = vld [vmem:[%s1] sm:$0xff]
  %v26 = vld [vmem:[%s1 + $0x8] sm:$0xff]
  %v27 = vld [vmem:[%s1 + $0x10] sm:$0xff]
  %v28 = vld [vmem:[%s1 + $0x18] sm:$0xff]
  %vm29 = vcmask 261120
  %v31 = vsel %vm29, %v23, 0
  %v34 = vsel %vm29, %v24, 0
  %36 = vmatpush.msra.mxu0 0.0
  %37 = vmatpush.msra.mxu0 0.0
  %38 = vmatpush.msra.mxu0 0.0
  %39 = vmatpush.msra.mxu0 0.0
  %40 = vmatpush.msra.mxu0 0.0
  %41 = vmatpush.msra.mxu0 0.0
  %42 = vmatpush.msra.mxu0 0.0
  %43 = vmatpush.msra.mxu0 0.0
  %44 = vmatpush.msra.mxu0 0.0
  %45 = vmatpush.msra.mxu0 0.0
  %46 = vmatpush.msra.mxu0 0.0
  %47 = vmatpush.msra.mxu0 0.0
  %48 = vmatpush.msra.mxu0 %v28
  %49 = vmatpush.msra.mxu0 %v27
  %50 = vmatpush.msra.mxu0 %v26
  %51 = vmatpush.msra.mxu0 %v25
  %52 = vmatmul.f32.gmra.mxu0 %v31
  %v53 = vpop.f32.mrf.mxu0
  %v54 = vadd.f32 0.0, %v53
  %55 = vmatmul.f32.gmra.mxu0 %v34
  %v56 = vpop.f32.mrf.mxu0
  %v57 = vadd.f32 0.0, %v56
  %58 = vdwg.mxu0
  %v59 = vadd.f32 %v21, %v54
  %v60 = vadd.f32 %v22, %v57
  %vm61 = vcmask 785408
  %62 = vst.msk [vmem:[#allocation2] sm:$0xff] %vm61, %v59
  %63 = vst.msk [vmem:[#allocation2 + $0x8] sm:$0xff] %vm61, %v60
  // Predicated region
  $region18: #{my_transformer_decoder.25} parent=0 // pred_check
    %p64 = pneg %p14
  $region19: #{my_transformer_decoder.25} parent=0 // pred_check_branch
    %66 = sbr.rel (%p64) target = $region21
  $region20: #{my_transformer_decoder.25} parent=0 // pred_region
    %v67 = vld [vmem:[#allocation2] sm:$0xff]
    %v68 = vld [vmem:[#allocation2 + $0x8] sm:$0xff]
    %v69 = vld [vmem:[%s2] sm:$0x1]
    %v71 = vperm.slane %v69, 0
    %v73 = vadd.f32 %v67, %v71
    %v74 = vadd.f32 %v68, %v71
    %75 = vst.msk [vmem:[%s3] sm:$0xff] %vm61, %v73
    %76 = vst.msk [vmem:[%s3 + $0x8] sm:$0xff] %vm61, %v74
  $region21: #{my_transformer_decoder.25} parent=0 // pred_fallthru
    _
  // Predicated region
  $region22: #{my_transformer_decoder.25} parent=0 // pred_check
    _
  $region23: #{my_transformer_decoder.25} parent=0 // pred_check_branch
    %78 = sbr.rel (0) target = $region25
  $region24: #{my_transformer_decoder.25} parent=0 // pred_region
    _
  $region25: #{my_transformer_decoder.25} parent=0 // pred_fallthru
    _
  // Predicated region
  $region26: #{my_transformer_decoder.25} parent=0 // pred_check
    _
  $region27: #{my_transformer_decoder.25} parent=0 // pred_check_branch
    %80 = sbr.rel (0) target = $region29
  $region28: #{my_transformer_decoder.25} parent=0 // pred_region
    _
  $region29: #{my_transformer_decoder.25} parent=0 // pred_fallthru
    _

// kernel: my_transformer_decoder.24
$region0: #{my_transformer_decoder.24}
  #allocation0 [shape = 'u32[]', space=smem, size = 0x4, offset = 0x4, fixed_abs, tag = 'smem constant byte address 0x4 - core index']
  #allocation1 [shape = 'u32[72,128]{1,0:T(1,128)}', space=vmem, size = 0x9000, scoped, tag = 'internal scratch']
  #allocation2 [shape = 'f32[16,32]{1,0:T(8,128)}', space=vmem, size = 0x2000, scoped, tag = 'scratch operand']
  %s0 = inlined_call_operand.vmem [shape: f32[16,32], index: 0, kind: input, shape index: {}]
  %s1 = inlined_call_operand.vmem [shape: f32[32,64], index: 1, kind: input, shape index: {}]
  %s2 = inlined_call_operand.vmem [shape: f32[1,64], index: 2, kind: input, shape index: {}]
  %s3 = inlined_call_operand.vmem [shape: f32[64,32], index: 3, kind: input, shape index: {}]
  %s4 = inlined_call_operand.vmem [shape: f32[1,32], index: 4, kind: input, shape index: {}]
  %s5 = inlined_call_operand.vmem [shape: f32[1,32], index: 5, kind: input, shape index: {}]
  %s6 = inlined_call_operand.vmem [shape: f32[1,32], index: 6, kind: input, shape index: {}]
  %s7 = inlined_call_operand.vmem [shape: f32[16,32], index: 7, kind: output, shape index: {}]
  %s8 = sld [smem:[#allocation0]]
  $region46: #{my_transformer_decoder.24} parent=0
    _
  %s10 = ssub.s32 1, %s8
  %s11 = scalar_select 0, %s10, %s8
  // Predicated region
  $region2: #{my_transformer_decoder.24} parent=0 // pred_check
    _
  $region3: #{my_transformer_decoder.24} parent=0 // pred_check_branch
    %13 = sbr.rel (0) target = $region5
  $region4: #{my_transformer_decoder.24} parent=0 // pred_region
    _
  $region5: #{my_transformer_decoder.24} parent=0 // pred_fallthru
    _
  // Predicated region
  $region6: #{my_transformer_decoder.24} parent=0 // pred_check
    _
  $region7: #{my_transformer_decoder.24} parent=0 // pred_check_branch
    %15 = sbr.rel (0) target = $region9
  $region8: #{my_transformer_decoder.24} parent=0 // pred_region
    _
  $region9: #{my_transformer_decoder.24} parent=0 // pred_fallthru
    _
  // Predicated region
  $region10: #{my_transformer_decoder.24} parent=0 // pred_check
    _
  $region11: #{my_transformer_decoder.24} parent=0 // pred_check_branch
    %17 = sbr.rel (0) target = $region13
  $region12: #{my_transformer_decoder.24} parent=0 // pred_region
    _
  $region13: #{my_transformer_decoder.24} parent=0 // pred_fallthru
    _
  // Predicated region
  $region14: #{my_transformer_decoder.24} parent=0 // pred_check
    _
  $region15: #{my_transformer_decoder.24} parent=0 // pred_check_branch
    %19 = sbr.rel (0) target = $region17
  $region16: #{my_transformer_decoder.24} parent=0 // pred_region
    _
  $region17: #{my_transformer_decoder.24} parent=0 // pred_fallthru
    _
  // Predicated region
  $region18: #{my_transformer_decoder.24} parent=0 // pred_check
    _
  $region19: #{my_transformer_decoder.24} parent=0 // pred_check_branch
    %21 = sbr.rel (0) target = $region21
  $region20: #{my_transformer_decoder.24} parent=0 // pred_region
    _
  $region21: #{my_transformer_decoder.24} parent=0 // pred_fallthru
    _
  // Predicated region
  $region22: #{my_transformer_decoder.24} parent=0 // pred_check
    _
  $region23: #{my_transformer_decoder.24} parent=0 // pred_check_branch
    %23 = sbr.rel (0) target = $region25
  $region24: #{my_transformer_decoder.24} parent=0 // pred_region
    _
  $region25: #{my_transformer_decoder.24} parent=0 // pred_fallthru
    _
  // Predicated region
  $region26: #{my_transformer_decoder.24} parent=0 // pred_check
    _
  $region27: #{my_transformer_decoder.24} parent=0 // pred_check_branch
    %25 = sbr.rel (0) target = $region29
  $region28: #{my_transformer_decoder.24} parent=0 // pred_region
    _
  $region29: #{my_transformer_decoder.24} parent=0 // pred_fallthru
    _
  %p26 = scmp.eq.s32.totalorder 0, 0
  // Predicated region
  $region30: #{my_transformer_decoder.24} parent=0 // pred_check
    %p27 = pneg %p26
  $region31: #{my_transformer_decoder.24} parent=0 // pred_check_branch
    %29 = sbr.rel (%p27) target = $region33
  $region32: #{my_transformer_decoder.24} parent=0 // pred_region
    %vm30 = vcmask 261120
    %31 = vst.msk [vmem:[#allocation2] sm:$0xff] %vm30, 0.0
    %32 = vst.msk [vmem:[#allocation2 + $0x8] sm:$0xff] %vm30, 0.0
  $region33: #{my_transformer_decoder.24} parent=0 // pred_fallthru
    _
  %v33 = vld [vmem:[%s0] sm:$0xff]
  %v34 = vld [vmem:[%s0 + $0x8] sm:$0xff]
  %v35 = vld [vmem:[%s1] sm:$0xff]
  %v36 = vld [vmem:[%s1 + $0x8] sm:$0xff]
  %v37 = vld [vmem:[%s1 + $0x10] sm:$0xff]
  %v38 = vld [vmem:[%s1 + $0x18] sm:$0xff]
  %v39 = vld [vmem:[%s2] sm:$0x1]
  %v41 = vperm.slane %v39, 0
  %vm43 = vcmask 261120
  %v45 = vsel %vm43, %v33, 0
  %v48 = vsel %vm43, %v34, 0
  %50 = vmatpush.msra.mxu0 0.0
  %51 = vmatpush.msra.mxu0 0.0
  %52 = vmatpush.msra.mxu0 0.0
  %53 = vmatpush.msra.mxu0 0.0
  %54 = vmatpush.msra.mxu0 0.0
  %55 = vmatpush.msra.mxu0 0.0
  %56 = vmatpush.msra.mxu0 0.0
  %57 = vmatpush.msra.mxu0 0.0
  %58 = vmatpush.msra.mxu0 0.0
  %59 = vmatpush.msra.mxu0 0.0
  %60 = vmatpush.msra.mxu0 0.0
  %61 = vmatpush.msra.mxu0 0.0
  %62 = vmatpush.msra.mxu0 %v38
  %63 = vmatpush.msra.mxu0 %v37
  %64 = vmatpush.msra.mxu0 %v36
  %65 = vmatpush.msra.mxu0 %v35
  %66 = vmatmul.f32.gmra.mxu0 %v45
  %v67 = vpop.f32.mrf.mxu0
  %v68 = vadd.f32 %v41, %v67
  %69 = vmatmul.f32.gmra.mxu0 %v48
  %v70 = vpop.f32.mrf.mxu0
  %v71 = vadd.f32 %v41, %v70
  %72 = vdwg.mxu0
  %v73 = vmax.f32 %v68, 0.0
  %v74 = vmax.f32 %v71, 0.0
  %v75 = vld [vmem:[#allocation2] sm:$0xff]
  %v76 = vld [vmem:[#allocation2 + $0x8] sm:$0xff]
  %v77 = vld [vmem:[%s3] sm:$0xff]
  %v78 = vld [vmem:[%s3 + $0x8] sm:$0xff]
  %v79 = vld [vmem:[%s3 + $0x10] sm:$0xff]
  %v80 = vld [vmem:[%s3 + $0x18] sm:$0xff]
  %v81 = vld [vmem:[%s3 + $0x20] sm:$0xff]
  %v82 = vld [vmem:[%s3 + $0x28] sm:$0xff]
  %v83 = vld [vmem:[%s3 + $0x30] sm:$0xff]
  %v84 = vld [vmem:[%s3 + $0x38] sm:$0xff]
  %vm85 = vcmask 523264
  %v87 = vsel %vm85, %v73, 0
  %v90 = vsel %vm85, %v74, 0
  %92 = vmatpush.msra.mxu0 0.0
  %93 = vmatpush.msra.mxu0 0.0
  %94 = vmatpush.msra.mxu0 0.0
  %95 = vmatpush.msra.mxu0 0.0
  %96 = vmatpush.msra.mxu0 0.0
  %97 = vmatpush.msra.mxu0 0.0
  %98 = vmatpush.msra.mxu0 0.0
  %99 = vmatpush.msra.mxu0 0.0
  %100 = vmatpush.msra.mxu0 %v84
  %101 = vmatpush.msra.mxu0 %v83
  %102 = vmatpush.msra.mxu0 %v82
  %103 = vmatpush.msra.mxu0 %v81
  %104 = vmatpush.msra.mxu0 %v80
  %105 = vmatpush.msra.mxu0 %v79
  %106 = vmatpush.msra.mxu0 %v78
  %107 = vmatpush.msra.mxu0 %v77
  %108 = vmatmul.f32.gmra.mxu0 %v87
  %v109 = vpop.f32.mrf.mxu0
  %v110 = vadd.f32 0.0, %v109
  %111 = vmatmul.f32.gmra.mxu0 %v90
  %v112 = vpop.f32.mrf.mxu0
  %v113 = vadd.f32 0.0, %v112
  %114 = vdwg.mxu0
  %v115 = vadd.f32 %v75, %v110
  %v116 = vadd.f32 %v76, %v113
  %117 = vst.msk [vmem:[#allocation2] sm:$0xff] %vm43, %v115
  %118 = vst.msk [vmem:[#allocation2 + $0x8] sm:$0xff] %vm43, %v116
  // Predicated region
  $region34: #{my_transformer_decoder.24} parent=0 // pred_check
    %p119 = pneg %p26
  $region35: #{my_transformer_decoder.24} parent=0 // pred_check_branch
    %121 = sbr.rel (%p119) target = $region37
  $region36: #{my_transformer_decoder.24} parent=0 // pred_region
    %v122 = vld [vmem:[#allocation2] sm:$0xff]
    %v123 = vld [vmem:[#allocation2 + $0x8] sm:$0xff]
    %v124 = vld [vmem:[%s4] sm:$0x1]
    %v126 = vperm.slane %v124, 0
    %v128 = vadd.f32 %v122, %v126
    %v129 = vadd.f32 %v123, %v126
    %v130 = vld [vmem:[%s0] sm:$0xff]
    %v131 = vld [vmem:[%s0 + $0x8] sm:$0xff]
    %v132 = vadd.f32 %v128, %v130
    %v133 = vadd.f32 %v129, %v131
    %v134 = vsel %vm43, %v132, 0.0
    %135 = vadd.xlane.f32.xlu0 %v134
    %v136 = vpop.xlane.xlu0 %135
    %v137 = vsel %vm43, %v133, 0.0
    %138 = vadd.xlane.f32.xlu0 %v137
    %v139 = vpop.xlane.xlu0 %138
    %v140 = vrcp.pop 32.0
    %v141 = vmul.f32 32.0, %v140
    %v142 = vsub.f32 1.0, %v141
    %v143 = vmul.f32 %v140, %v142
    %v144 = vadd.f32 %v140, %v143
    %vm145 = vweird.f32 %v140
    %v146 = vsel %vm145, %v140, %v144
    %v147 = vmul.f32 %v136, %v146
    %v148 = vmul.f32 %v139, %v146
    %v149 = vsub.f32 %v132, %v147
    %v150 = vsub.f32 %v133, %v148
    %v151 = vmul.f32 %v149, %v149
    %v152 = vmul.f32 %v150, %v150
    %v153 = vsel %vm43, %v151, 0.0
    %154 = vadd.xlane.f32.xlu0 %v153
    %v155 = vpop.xlane.xlu0 %154
    %v156 = vsel %vm43, %v152, 0.0
    %157 = vadd.xlane.f32.xlu0 %v156
    %v158 = vpop.xlane.xlu0 %157
    %v159 = vmul.f32 %v155, %v146
    %v160 = vmul.f32 %v158, %v146
    %v161 = vadd.f32 %v159, 1e-05
    %v162 = vadd.f32 %v160, 1e-05
    %v163 = vrsqrt.pop %v161
    %v164 = vmul.f32 %v163, %v161
    %v165 = vmul.f32 %v164, %v163
    %v166 = vmul.f32 0.5, %v165
    %v167 = vsub.f32 1.5, %v166
    %v168 = vmul.f32 %v163, %v167
    %vm169 = vweird.f32 %v161
    %vm170 = vweird.f32 %v163
    %vm171 = vmor %vm169, %vm170
    %v172 = vsel %vm171, %v163, %v168
    %v173 = vrsqrt.pop %v162
    %v174 = vmul.f32 %v173, %v162
    %v175 = vmul.f32 %v174, %v173
    %v176 = vmul.f32 0.5, %v175
    %v177 = vsub.f32 1.5, %v176
    %v178 = vmul.f32 %v173, %v177
    %vm179 = vweird.f32 %v162
    %vm180 = vweird.f32 %v173
    %vm181 = vmor %vm179, %vm180
    %v182 = vsel %vm181, %v173, %v178
    %v183 = vmul.f32 %v149, %v172
    %v184 = vmul.f32 %v150, %v182
    %v185 = vld [vmem:[%s5] sm:$0x1]
    %v187 = vperm.slane %v185, 0
    %v189 = vmul.f32 %v183, %v187
    %v190 = vmul.f32 %v184, %v187
    %v191 = vld [vmem:[%s6] sm:$0x1]
    %v193 = vperm.slane %v191, 0
    %v195 = vadd.f32 %v189, %v193
    %v196 = vadd.f32 %v190, %v193
    %197 = vst.msk [vmem:[%s7] sm:$0xff] %vm43, %v195
    %198 = vst.msk [vmem:[%s7 + $0x8] sm:$0xff] %vm43, %v196
  $region37: #{my_transformer_decoder.24} parent=0 // pred_fallthru
    _
  // Predicated region
  $region38: #{my_transformer_decoder.24} parent=0 // pred_check
    _
  $region39: #{my_transformer_decoder.24} parent=0 // pred_check_branch
    %200 = sbr.rel (0) target = $region41
  $region40: #{my_transformer_decoder.24} parent=0 // pred_region
    _
  $region41: #{my_transformer_decoder.24} parent=0 // pred_fallthru
    _
  // Predicated region
  $region42: #{my_transformer_decoder.24} parent=0 // pred_check
    _
  $region43: #{my_transformer_decoder.24} parent=0 // pred_check_branch
    %202 = sbr.rel (0) target = $region45
  $region44: #{my_transformer_decoder.24} parent=0 // pred_region
    _
  $region45: #{my_transformer_decoder.24} parent=0 // pred_fallthru
    _

// kernel: my_transformer_decoder.33
$region0: #{my_transformer_decoder.33}
  #allocation0 [shape = 'u32[]', space=smem, size = 0x4, offset = 0x4, fixed_abs, tag = 'smem constant byte address 0x4 - core index']
  #allocation1 [shape = 'u32[72,128]{1,0:T(1,128)}', space=vmem, size = 0x9000, scoped, tag = 'internal scratch']
  %s0 = inlined_call_operand.vmem [shape: f32[16,32], index: 0, kind: input, shape index: {}]
  %s1 = inlined_call_operand.vmem [shape: f32[1,32], index: 1, kind: input, shape index: {}]
  %s2 = inlined_call_operand.vmem [shape: f32[1,32], index: 2, kind: input, shape index: {}]
  %s3 = inlined_call_operand.hbm [shape: f32[16,32], index: 3, kind: output, shape index: {}]
  %s4 = sld [smem:[#allocation0]]
  $region22: #{my_transformer_decoder.33} parent=0
    _
  %s6 = ssub.s32 1, %s4
  %s7 = scalar_select 0, %s6, %s4
  $region1: #{my_transformer_decoder.33} parent=0
    #allocation2 [shape = 'u8[8192]{0}', space=vmem, size = 0x2000, scoped, tag = 'output window, operand 0, single buffered']
    #allocation3 [shape = 's32[1]{0}', space=sflag, size = 0x4, scoped, tag = 'scoped memory for my_transformer_decoder.33']
    %8 = vsyncpa [#allocation3], 0
    // Predicated region
    $region2: #{my_transformer_decoder.33} parent=1 // pred_check
      _
    $region3: #{my_transformer_decoder.33} parent=1 // pred_check_branch
      %10 = sbr.rel (0) target = $region5
    $region4: #{my_transformer_decoder.33} parent=1 // pred_region
      _
    $region5: #{my_transformer_decoder.33} parent=1 // pred_fallthru
      _
    // Predicated region
    $region6: #{my_transformer_decoder.33} parent=1 // pred_check
      _
    $region7: #{my_transformer_decoder.33} parent=1 // pred_check_branch
      %12 = sbr.rel (0) target = $region9
    $region8: #{my_transformer_decoder.33} parent=1 // pred_region
      _
    $region9: #{my_transformer_decoder.33} parent=1 // pred_fallthru
      _
    // Predicated region
    $region10: #{my_transformer_decoder.33} parent=1 // pred_check
      _
    $region11: #{my_transformer_decoder.33} parent=1 // pred_check_branch
      %14 = sbr.rel (0) target = $region13
    $region12: #{my_transformer_decoder.33} parent=1 // pred_region
      _
    $region13: #{my_transformer_decoder.33} parent=1 // pred_fallthru
      _
    %v15 = vld [vmem:[%s0] sm:$0xff]
    %v16 = vld [vmem:[%s0 + $0x8] sm:$0xff]
    %vm17 = vcmask 261120
    %v18 = vsel %vm17, %v15, 0.0
    %19 = vadd.xlane.f32.xlu0 %v18
    %v20 = vpop.xlane.xlu0 %19
    %v21 = vsel %vm17, %v16, 0.0
    %22 = vadd.xlane.f32.xlu0 %v21
    %v23 = vpop.xlane.xlu0 %22
    %v24 = vrcp.pop 32.0
    %v25 = vmul.f32 32.0, %v24
    %v26 = vsub.f32 1.0, %v25
    %v27 = vmul.f32 %v24, %v26
    %v28 = vadd.f32 %v24, %v27
    %vm29 = vweird.f32 %v24
    %v30 = vsel %vm29, %v24, %v28
    %v31 = vmul.f32 %v20, %v30
    %v32 = vmul.f32 %v23, %v30
    %v33 = vsub.f32 %v15, %v31
    %v34 = vsub.f32 %v16, %v32
    %v35 = vmul.f32 %v33, %v33
    %v36 = vmul.f32 %v34, %v34
    %v37 = vsel %vm17, %v35, 0.0
    %38 = vadd.xlane.f32.xlu0 %v37
    %v39 = vpop.xlane.xlu0 %38
    %v40 = vsel %vm17, %v36, 0.0
    %41 = vadd.xlane.f32.xlu0 %v40
    %v42 = vpop.xlane.xlu0 %41
    %v43 = vmul.f32 %v39, %v30
    %v44 = vmul.f32 %v42, %v30
    %v45 = vadd.f32 %v43, 1e-05
    %v46 = vadd.f32 %v44, 1e-05
    %v47 = vrsqrt.pop %v45
    %v48 = vmul.f32 %v47, %v45
    %v49 = vmul.f32 %v48, %v47
    %v50 = vmul.f32 0.5, %v49
    %v51 = vsub.f32 1.5, %v50
    %v52 = vmul.f32 %v47, %v51
    %vm53 = vweird.f32 %v45
    %vm54 = vweird.f32 %v47
    %vm55 = vmor %vm53, %vm54
    %v56 = vsel %vm55, %v47, %v52
    %v57 = vrsqrt.pop %v46
    %v58 = vmul.f32 %v57, %v46
    %v59 = vmul.f32 %v58, %v57
    %v60 = vmul.f32 0.5, %v59
    %v61 = vsub.f32 1.5, %v60
    %v62 = vmul.f32 %v57, %v61
    %vm63 = vweird.f32 %v46
    %vm64 = vweird.f32 %v57
    %vm65 = vmor %vm63, %vm64
    %v66 = vsel %vm65, %v57, %v62
    %v67 = vmul.f32 %v33, %v56
    %v68 = vmul.f32 %v34, %v66
    %v69 = vld [vmem:[%s1] sm:$0x1]
    %v71 = vperm.slane %v69, 0
    %v73 = vmul.f32 %v67, %v71
    %v74 = vmul.f32 %v68, %v71
    %v75 = vld [vmem:[%s2] sm:$0x1]
    %v77 = vperm.slane %v75, 0
    %v79 = vadd.f32 %v73, %v77
    %v80 = vadd.f32 %v74, %v77
    %81 = vst.msk [vmem:[#allocation2] sm:$0xff] %vm17, %v79
    %82 = vst.msk [vmem:[#allocation2 + $0x8] sm:$0xff] %vm17, %v80
    // Predicated region
    $region14: #{my_transformer_decoder.33} parent=1 // pred_check
      _
    $region15: #{my_transformer_decoder.33} parent=1 // pred_check_branch
      %84 = sbr.rel (0) target = $region17
    $region16: #{my_transformer_decoder.33} parent=1 // pred_region
      %86 = vsyncadd [#allocation3], 0
      %s87 = sshll.u32 [#allocation2], 4
      %s88 = int_to_ptr.vmem [resolvable:$true] %s87
      %s89 = sshll.u32 %s3, 4
      %s90 = int_to_ptr.hbm [resolvable:$true] %s89
      %95 = dma.vmem_to_hbm [thread:$0]  %s88, 256, %s90, [#allocation3], 128, 128, 8
    $region17: #{my_transformer_decoder.33} parent=1 // pred_fallthru
      _
    // Predicated region
    $region18: #{my_transformer_decoder.33} parent=1 // pred_check
      _
    $region19: #{my_transformer_decoder.33} parent=1 // pred_check_branch
      %97 = sbr.rel (0) target = $region21
    $region20: #{my_transformer_decoder.33} parent=1 // pred_region
      %99 = dma.done [#allocation3], 256
    $region21: #{my_transformer_decoder.33} parent=1 // pred_fallthru
      _
    %100 = vsyncpa [#allocation3], 1

</llo_original>
